<compile_context>
chip_gen: v6e
topology: v6e:2x2x1
jax: 0.10.0
libtpu: 0.0.40
codegen_flags: <defaults>
</compile_context>

<pallas_src>
import jax
import jax.numpy as jnp
from jax.experimental import pallas as pl
from jax.experimental.pallas import tpu as pltpu

HIDDEN = 768           # hidden_size (LayerNorm(768) is hardcoded in the module)
MID = 512              # classifier intermediate Linear width (folded away)
NUM_CLASSES = 5
NUM_CLASSES_PAD = 128  # pad class dim to a full lane width; slice outside
BATCH = 8
SEQ = 8
VOCAB = 64
LN_EPS = 1e-5          # PyTorch nn.LayerNorm default


# ----------------------------------------------------------------------------
# Pallas kernel: pooler dense+tanh -> LayerNorm (affine folded) -> classifier
# ----------------------------------------------------------------------------
def head_kernel(pooled_ref, pool_wq_ref, pool_scale_ref, pool_b_ref,
                w_ref, b_ref, out_ref):
    x = pooled_ref[...]                                        # (BB, H) bf16

    # BERT pooler dense + tanh.  int8 weight storage (halves the dominant
    # weight DMA); dequant is an exact int8->f32->bf16 cast, the matmul is
    # bf16 with f32 accumulation, and the per-output-channel scale is applied
    # to the f32 accumulator (BB*H multiplies instead of H*H).  Portable to
    # v7x since the MXU never sees an integer operand.
    w_pool = pool_wq_ref[...].astype(jnp.float32).astype(jnp.bfloat16)
    h = jnp.dot(x, w_pool, preferred_element_type=jnp.float32)
    h = h * pool_scale_ref[...] + pool_b_ref[...]
    h = jnp.tanh(h)                                            # (BB, H) f32

    # self.dropout(p=dr_rate): identity at inference.

    # LayerNorm(768) statistics in a single pass: the two reductions are
    # independent (overlap on the XLUs); var = E[h^2] - mean^2 (biased, as in
    # PyTorch).  gamma/beta are folded into w_ref/b_ref offline.
    inv_h = 1.0 / HIDDEN
    mean = jnp.sum(h, axis=-1, keepdims=True) * inv_h          # (BB, 1)
    ex2 = jnp.sum(h * h, axis=-1, keepdims=True) * inv_h       # (BB, 1)
    var = ex2 - mean * mean
    y = (h - mean) * jax.lax.rsqrt(var + LN_EPS)

    # classifier = Dropout(identity) -> Linear(768,512) -> Linear(512,C), no
    # activation between the Linears, plus the LN affine: all folded offline
    # into one (768, C_pad) bf16 weight and one f32 bias -> one MXU matmul.
    out = jnp.dot(y.astype(jnp.bfloat16), w_ref[...],
                  preferred_element_type=jnp.float32) + b_ref[...]
    out_ref[...] = out.astype(out_ref.dtype)


def classifier_head(pooled, params, *, block_rows=None):
    B, H = pooled.shape
    Cp = params["w_fused"].shape[1]

    # Gate the batch-parallel split: the kernel is weight-DMA bound at
    # small/medium batch and the weight index_maps are replicated, so every
    # grid step (and each v7x TensorCore under a "parallel" split) would DMA
    # its own full copy of pool_w + w_fused.  Keep a single grid step (weights
    # DMA'd exactly once) until the batch is large enough that per-step matmul
    # time exceeds the duplicated weight DMA.
    if block_rows is None:
        block_rows = B if B <= 256 else 256
    assert B % block_rows == 0, "batch must be a multiple of block_rows"
    grid = (B // block_rows,)

    row = lambda i: (i, 0)   # batch-tiled operands
    rep = lambda i: (0, 0)   # weights/biases replicated across batch blocks

    # bf16 activations into the kernel: halves activation DMA, drops a cast.
    pooled_bf16 = pooled.astype(jnp.bfloat16)

    # Advisory cost: helps XLA overlap the embedding/mean-pool with weight DMA.
    flops = 2 * B * H * H + 2 * B * H * Cp
    bytes_accessed = (B * H * 2            # pooled activations (bf16)
                      + H * H * 1          # pool_w (int8)
                      + H * 4 + H * 4      # pool_scale, pool_b (f32)
                      + H * Cp * 2         # fused LN+classifier weight (bf16)
                      + Cp * 4             # fused bias (f32)
                      + B * Cp * 4)        # output (f32)

    out_pad = pl.pallas_call(
        head_kernel,
        out_shape=jax.ShapeDtypeStruct((B, Cp), jnp.float32),
        grid=grid,
        in_specs=[
            pl.BlockSpec((block_rows, H), row),   # pooled activations (bf16)
            pl.BlockSpec((H, H), rep),            # pooler dense W (int8)
            pl.BlockSpec((1, H), rep),            # pooler per-channel scale
            pl.BlockSpec((1, H), rep),            # pooler dense bias (f32)
            pl.BlockSpec((H, Cp), rep),           # fused LN+classifier W (bf16)
            pl.BlockSpec((1, Cp), rep),           # fused LN+classifier b (f32)
        ],
        out_specs=pl.BlockSpec((block_rows, Cp), row),
        compiler_params=pltpu.CompilerParams(
            dimension_semantics=("parallel",)),
        cost_estimate=pl.CostEstimate(
            flops=flops, transcendentals=B * H + B,
            bytes_accessed=bytes_accessed),
    )(pooled_bf16,
      params["pool_w_q"], params["pool_scale"].reshape(1, H),
      params["pool_b"].reshape(1, H),
      params["w_fused"], params["b_fused"].reshape(1, Cp))
    return out_pad[:, :NUM_CLASSES]


# ----------------------------------------------------------------------------
# Plain-JAX glue: attention mask + synthetic BERT encoder stand-in
# ----------------------------------------------------------------------------
def gen_attention_mask(token_ids, valid_length):
    # attention_mask[i, :valid_length[i]] = 1
    pos = jnp.arange(token_ids.shape[1])[None, :]
    return (pos < valid_length[:, None]).astype(jnp.float32)


def synthetic_bert_embed_pool(token_ids, segment_ids, attention_mask, p):
    # TODO(synk): the real pretrained BERT encoder has no in-script equivalent;
    # this deterministic embedding + masked mean-pool feeds the pooler dense
    # inside the Pallas kernel.
    emb = p["tok_emb"][token_ids] + p["seg_emb"][segment_ids]       # (B, S, H)
    m = attention_mask[..., None]                                   # (B, S, 1)
    return (emb * m).sum(axis=1) / jnp.maximum(m.sum(axis=1), 1.0)  # (B, H)


def bert_classifier_forward(params, token_ids, valid_length, segment_ids):
    attention_mask = gen_attention_mask(token_ids, valid_length)
    pooled = synthetic_bert_embed_pool(token_ids, segment_ids,
                                       attention_mask, params)
    return classifier_head(pooled, params)


# ----------------------------------------------------------------------------
# Deterministic parameter construction (offline folds + int8 quantization)
# ----------------------------------------------------------------------------
def make_params(key):
    ks = jax.random.split(key, 8)

    # Original module parameters (PyTorch nn.Linear weights pre-transposed to
    # (in, out)).
    w1 = 0.02 * jax.random.normal(ks[3], (HIDDEN, MID), jnp.float32)
    b1 = 0.02 * jax.random.normal(ks[4], (MID,), jnp.float32)
    w2 = 0.02 * jax.random.normal(ks[5], (MID, NUM_CLASSES), jnp.float32)
    b2 = 0.02 * jax.random.normal(ks[6], (NUM_CLASSES,), jnp.float32)
    ln_gamma = jnp.ones((HIDDEN,), jnp.float32)
    ln_beta = jnp.zeros((HIDDEN,), jnp.float32)

    # Fold 1: Linear(768->512) ∘ Linear(512->C) (no nonlinearity between them).
    w_cls = w1 @ w2                     # (768, C)
    b_cls = b1 @ w2 + b2                # (C,)
    # Fold 2: LayerNorm affine into the classifier:
    #   LN(h) @ Wc + bc == ((h-mean)*rsqrt(var)) @ (gamma[:,None]*Wc)
    #                      + (beta @ Wc + bc)
    w_fused = ln_gamma[:, None] * w_cls
    b_fused = ln_beta @ w_cls + b_cls
    w_fused_pad = (jnp.zeros((HIDDEN, NUM_CLASSES_PAD), jnp.float32)
                   .at[:, :NUM_CLASSES].set(w_fused))
    b_fused_pad = (jnp.zeros((NUM_CLASSES_PAD,), jnp.float32)
                   .at[:NUM_CLASSES].set(b_fused))

    # Pooler dense weight: int8 storage with per-output-channel f32 scales.
    pool_w = 0.02 * jax.random.normal(ks[2], (HIDDEN, HIDDEN), jnp.float32)
    pool_scale = jnp.maximum(jnp.max(jnp.abs(pool_w), axis=0), 1e-8) / 127.0
    pool_w_q = jnp.round(pool_w / pool_scale[None, :]).astype(jnp.int8)

    return {
        "tok_emb": 0.02 * jax.random.normal(ks[0], (VOCAB, HIDDEN), jnp.float32),
        "seg_emb": 0.02 * jax.random.normal(ks[1], (2, HIDDEN), jnp.float32),
        "pool_w_q": pool_w_q,                 # int8 (768, 768)
        "pool_scale": pool_scale,             # f32  (768,)
        "pool_b": jnp.zeros((HIDDEN,), jnp.float32),
        # Fused LN-affine + classifier weight stored bf16; bias stays f32.
        "w_fused": w_fused_pad.astype(jnp.bfloat16),
        "b_fused": b_fused_pad,
    }


if __name__ == "__main__":
    key = jax.random.PRNGKey(0)
    k_in, k_seg, k_par = jax.random.split(key, 3)

    token_ids = jax.random.randint(k_in, (BATCH, SEQ), 0, VOCAB, dtype=jnp.int32)
    segment_ids = jax.random.randint(k_seg, (BATCH, SEQ), 0, 2, dtype=jnp.int32)
    valid_length = jnp.array([8, 4, 6, 8, 2, 7, 5, 3], dtype=jnp.int32)

    params = make_params(k_par)

    out = jax.jit(bert_classifier_forward)(params, token_ids, valid_length,
                                           segment_ids)
    jax.block_until_ready(out)
    assert out.shape == (BATCH, NUM_CLASSES)
    print("KERNEL_OK")
</pallas_src>

<mosaic_0001>
module attributes {stable_mosaic.version = 11 : i64} {
  func.func @head_kernel(%arg0: i32, %arg1: memref<8x768xbf16, #tpu.memory_space<vmem>>, %arg2: memref<768x768xi8, #tpu.memory_space<vmem>>, %arg3: memref<1x768xf32, #tpu.memory_space<vmem>>, %arg4: memref<1x768xf32, #tpu.memory_space<vmem>>, %arg5: memref<768x128xbf16, #tpu.memory_space<vmem>>, %arg6: memref<1x128xf32, #tpu.memory_space<vmem>>, %arg7: memref<8x128xf32, #tpu.memory_space<vmem>>) attributes {dimension_semantics = [#tpu.dimension_semantics<parallel>], iteration_bounds = array<i64: 1>, scalar_prefetch = 0 : i64, scratch_operands = 0 : i64, tpu.core_type = #tpu.core_type<tc>, window_params = [{transform_indices = @transform_0, window_bounds = array<i64: 8, 768>}, {pipeline_mode = #tpu.pipeline_mode<synchronous>, transform_indices = @transform_1, window_bounds = array<i64: 768, 768>}, {pipeline_mode = #tpu.pipeline_mode<synchronous>, transform_indices = @transform_2, window_bounds = array<i64: 1, 768>}, {pipeline_mode = #tpu.pipeline_mode<synchronous>, transform_indices = @transform_3, window_bounds = array<i64: 1, 768>}, {pipeline_mode = #tpu.pipeline_mode<synchronous>, transform_indices = @transform_4, window_bounds = array<i64: 768, 128>}, {pipeline_mode = #tpu.pipeline_mode<synchronous>, transform_indices = @transform_5, window_bounds = array<i64: 1, 128>}, {transform_indices = @transform_6, window_bounds = array<i64: 8, 128>}]} {
    %c0 = arith.constant 0 : index
    %c0_0 = arith.constant 0 : index
    %0 = vector.load %arg1[%c0, %c0_0] : memref<8x768xbf16, #tpu.memory_space<vmem>>, vector<8x768xbf16>
    %c0_1 = arith.constant 0 : index
    %c0_2 = arith.constant 0 : index
    %1 = vector.load %arg2[%c0_1, %c0_2] : memref<768x768xi8, #tpu.memory_space<vmem>>, vector<768x768xi8>
    %2 = arith.sitofp %1 : vector<768x768xi8> to vector<768x768xf32>
    %3 = arith.truncf %2 : vector<768x768xf32> to vector<768x768xbf16>
    %cst = arith.constant dense<0.000000e+00> : vector<8x768xf32>
    %4 = tpu.matmul %0, %3, %cst {dimension_numbers = #tpu.dot_dimension_numbers<[1], [0], [0], [1], [0, 0, 1, 1], [], []>} : vector<8x768xbf16>, vector<768x768xbf16>, vector<8x768xf32> -> vector<8x768xf32>
    %c0_3 = arith.constant 0 : index
    %c0_4 = arith.constant 0 : index
    %5 = vector.load %arg3[%c0_3, %c0_4] : memref<1x768xf32, #tpu.memory_space<vmem>>, vector<1x768xf32>
    %6 = vector.broadcast %5 : vector<1x768xf32> to vector<8x768xf32>
    %7 = arith.mulf %4, %6 : vector<8x768xf32>
    %c0_5 = arith.constant 0 : index
    %c0_6 = arith.constant 0 : index
    %8 = vector.load %arg4[%c0_5, %c0_6] : memref<1x768xf32, #tpu.memory_space<vmem>>, vector<1x768xf32>
    %9 = vector.broadcast %8 : vector<1x768xf32> to vector<8x768xf32>
    %10 = arith.addf %7, %9 : vector<8x768xf32>
    %11 = math.tanh %10 : vector<8x768xf32>
    %cst_7 = arith.constant dense<0.000000e+00> : vector<8xf32>
    %12 = vector.multi_reduction <add>, %11, %cst_7 [1] : vector<8x768xf32> to vector<8xf32>
    %13 = vector.shape_cast %12 : vector<8xf32> to vector<8x1xf32>
    %cst_8 = arith.constant 0.00130208337 : f32
    %14 = vector.broadcast %cst_8 : f32 to vector<8x1xf32>
    %15 = arith.mulf %13, %14 : vector<8x1xf32>
    %16 = arith.mulf %11, %11 : vector<8x768xf32>
    %cst_9 = arith.constant dense<0.000000e+00> : vector<8xf32>
    %17 = vector.multi_reduction <add>, %16, %cst_9 [1] : vector<8x768xf32> to vector<8xf32>
    %18 = vector.shape_cast %17 : vector<8xf32> to vector<8x1xf32>
    %cst_10 = arith.constant 0.00130208337 : f32
    %19 = vector.broadcast %cst_10 : f32 to vector<8x1xf32>
    %20 = arith.mulf %18, %19 : vector<8x1xf32>
    %21 = arith.mulf %15, %15 : vector<8x1xf32>
    %22 = arith.subf %20, %21 : vector<8x1xf32>
    %23 = vector.broadcast %15 : vector<8x1xf32> to vector<8x768xf32>
    %24 = arith.subf %11, %23 : vector<8x768xf32>
    %cst_11 = arith.constant 9.99999974E-6 : f32
    %25 = vector.broadcast %cst_11 : f32 to vector<8x1xf32>
    %26 = arith.addf %22, %25 : vector<8x1xf32>
    %27 = math.rsqrt %26 : vector<8x1xf32>
    %28 = vector.broadcast %27 : vector<8x1xf32> to vector<8x768xf32>
    %29 = arith.mulf %24, %28 : vector<8x768xf32>
    %30 = arith.truncf %29 : vector<8x768xf32> to vector<8x768xbf16>
    %c0_12 = arith.constant 0 : index
    %c0_13 = arith.constant 0 : index
    %31 = vector.load %arg5[%c0_12, %c0_13] : memref<768x128xbf16, #tpu.memory_space<vmem>>, vector<768x128xbf16>
    %cst_14 = arith.constant dense<0.000000e+00> : vector<8x128xf32>
    %32 = tpu.matmul %30, %31, %cst_14 {dimension_numbers = #tpu.dot_dimension_numbers<[1], [0], [0], [1], [0, 0, 1, 1], [], []>} : vector<8x768xbf16>, vector<768x128xbf16>, vector<8x128xf32> -> vector<8x128xf32>
    %c0_15 = arith.constant 0 : index
    %c0_16 = arith.constant 0 : index
    %33 = vector.load %arg6[%c0_15, %c0_16] : memref<1x128xf32, #tpu.memory_space<vmem>>, vector<1x128xf32>
    %34 = vector.broadcast %33 : vector<1x128xf32> to vector<8x128xf32>
    %35 = arith.addf %32, %34 : vector<8x128xf32>
    %c0_17 = arith.constant 0 : index
    %c0_18 = arith.constant 0 : index
    %36 = vector.load %arg7[%c0_17, %c0_18] : memref<8x128xf32, #tpu.memory_space<vmem>>, vector<8x128xf32>
    tpu.vector_store %arg7[%c0_17, %c0_18], %35 {strides = array<i32>} : memref<8x128xf32, #tpu.memory_space<vmem>>, vector<8x128xf32>,
    return
  }
  func.func @transform_0(%arg0: i32) -> (i32, i32) {
    %c0_i32 = arith.constant 0 : i32
    %c0_i32_0 = arith.constant 0 : i32
    return %arg0, %c0_i32 : i32, i32
  }
  func.func @transform_1(%arg0: i32) -> (i32, i32) {
    %c0_i32 = arith.constant 0 : i32
    %c0_i32_0 = arith.constant 0 : i32
    %c0_i32_1 = arith.constant 0 : i32
    return %c0_i32, %c0_i32_0 : i32, i32
  }
  func.func @transform_2(%arg0: i32) -> (i32, i32) {
    %c0_i32 = arith.constant 0 : i32
    %c0_i32_0 = arith.constant 0 : i32
    %c0_i32_1 = arith.constant 0 : i32
    return %c0_i32, %c0_i32_0 : i32, i32
  }
  func.func @transform_3(%arg0: i32) -> (i32, i32) {
    %c0_i32 = arith.constant 0 : i32
    %c0_i32_0 = arith.constant 0 : i32
    %c0_i32_1 = arith.constant 0 : i32
    return %c0_i32, %c0_i32_0 : i32, i32
  }
  func.func @transform_4(%arg0: i32) -> (i32, i32) {
    %c0_i32 = arith.constant 0 : i32
    %c0_i32_0 = arith.constant 0 : i32
    %c0_i32_1 = arith.constant 0 : i32
    return %c0_i32, %c0_i32_0 : i32, i32
  }
  func.func @transform_5(%arg0: i32) -> (i32, i32) {
    %c0_i32 = arith.constant 0 : i32
    %c0_i32_0 = arith.constant 0 : i32
    %c0_i32_1 = arith.constant 0 : i32
    return %c0_i32, %c0_i32_0 : i32, i32
  }
  func.func @transform_6(%arg0: i32) -> (i32, i32) {
    %c0_i32 = arith.constant 0 : i32
    %c0_i32_0 = arith.constant 0 : i32
    return %arg0, %c0_i32 : i32, i32
  }
}

</mosaic_0001>

<llo_original>
// kernel: bert_classifier_forward.1
$region0: #{bert_classifier_forward.1}
  #allocation0 [shape = 'u32[]', space=smem, size = 0x4, offset = 0x4, fixed_abs, tag = 'smem constant byte address 0x4 - core index']
  #allocation1 [shape = 'u32[144,128]{1,0:T(1,128)}', space=vmem, size = 0x12000, scoped, tag = 'internal scratch']
  %s0 = inlined_call_operand.vmem [shape: bf16[8,768], index: 0, kind: input, shape index: {}]
  %s1 = inlined_call_operand.vmem [shape: s8[768,768], index: 1, kind: input, shape index: {}]
  %s2 = inlined_call_operand.vmem [shape: f32[1,768], index: 2, kind: input, shape index: {}]
  %s3 = inlined_call_operand.vmem [shape: f32[1,768], index: 3, kind: input, shape index: {}]
  %s4 = inlined_call_operand.vmem [shape: bf16[768,128], index: 4, kind: input, shape index: {}]
  %s5 = inlined_call_operand.vmem [shape: f32[1,128], index: 5, kind: input, shape index: {}]
  %s6 = inlined_call_operand.hbm [shape: f32[8,128], index: 6, kind: output, shape index: {}]
  %s7 = sld [smem:[#allocation0]]
  $region34: #{bert_classifier_forward.1} parent=0
    _
  %s9 = ssub.s32 1, %s7
  %s10 = scalar_select 0, %s9, %s7
  $region1: #{bert_classifier_forward.1} parent=0
    #allocation2 [shape = 'u8[4096]{0}', space=vmem, size = 0x1000, scoped, tag = 'output window, operand 0, single buffered']
    #allocation3 [shape = 's32[1]{0}', space=sflag, size = 0x4, scoped, tag = 'scoped memory for bert_classifier_forward.1']
    %11 = vsyncpa [#allocation3], 0
    // Predicated region
    $region2: #{bert_classifier_forward.1} parent=1 // pred_check
      _
    $region3: #{bert_classifier_forward.1} parent=1 // pred_check_branch
      %13 = sbr.rel (0) target = $region5
    $region4: #{bert_classifier_forward.1} parent=1 // pred_region
      _
    $region5: #{bert_classifier_forward.1} parent=1 // pred_fallthru
      _
    // Predicated region
    $region6: #{bert_classifier_forward.1} parent=1 // pred_check
      _
    $region7: #{bert_classifier_forward.1} parent=1 // pred_check_branch
      %15 = sbr.rel (0) target = $region9
    $region8: #{bert_classifier_forward.1} parent=1 // pred_region
      _
    $region9: #{bert_classifier_forward.1} parent=1 // pred_fallthru
      _
    // Predicated region
    $region10: #{bert_classifier_forward.1} parent=1 // pred_check
      _
    $region11: #{bert_classifier_forward.1} parent=1 // pred_check_branch
      %17 = sbr.rel (0) target = $region13
    $region12: #{bert_classifier_forward.1} parent=1 // pred_region
      _
    $region13: #{bert_classifier_forward.1} parent=1 // pred_fallthru
      _
    // Predicated region
    $region14: #{bert_classifier_forward.1} parent=1 // pred_check
      _
    $region15: #{bert_classifier_forward.1} parent=1 // pred_check_branch
      %19 = sbr.rel (0) target = $region17
    $region16: #{bert_classifier_forward.1} parent=1 // pred_region
      _
    $region17: #{bert_classifier_forward.1} parent=1 // pred_fallthru
      _
    // Predicated region
    $region18: #{bert_classifier_forward.1} parent=1 // pred_check
      _
    $region19: #{bert_classifier_forward.1} parent=1 // pred_check_branch
      %21 = sbr.rel (0) target = $region21
    $region20: #{bert_classifier_forward.1} parent=1 // pred_region
      _
    $region21: #{bert_classifier_forward.1} parent=1 // pred_fallthru
      _
    // Predicated region
    $region22: #{bert_classifier_forward.1} parent=1 // pred_check
      _
    $region23: #{bert_classifier_forward.1} parent=1 // pred_check_branch
      %23 = sbr.rel (0) target = $region25
    $region24: #{bert_classifier_forward.1} parent=1 // pred_region
      _
    $region25: #{bert_classifier_forward.1} parent=1 // pred_fallthru
      _
    %v25 = vld [vmem:[%s0] sm:$0xff]
    %v26 = vld [vmem:[%s0 + $0x8] sm:$0xff]
    %v27 = vld [vmem:[%s0 + $0x10] sm:$0xff]
    %v28 = vld [vmem:[%s1] sm:$0xff]
    %v29 = vld [vmem:[%s1 + $0x8] sm:$0xff]
    %v30 = vld [vmem:[%s1 + $0x10] sm:$0xff]
    %v31 = vld [vmem:[%s1 + $0x18] sm:$0xff]
    %v32 = vld [vmem:[%s1 + $0x20] sm:$0xff]
    %v33 = vld [vmem:[%s1 + $0x28] sm:$0xff]
    %v34 = vld [vmem:[%s1 + $0x30] sm:$0xff]
    %v35 = vld [vmem:[%s1 + $0x38] sm:$0xff]
    %v36 = vld [vmem:[%s1 + $0x40] sm:$0xff]
    %v37 = vld [vmem:[%s1 + $0x48] sm:$0xff]
    %v38 = vld [vmem:[%s1 + $0x50] sm:$0xff]
    %v39 = vld [vmem:[%s1 + $0x58] sm:$0xff]
    %v40 = vld [vmem:[%s1 + $0x60] sm:$0xff]
    %v41 = vld [vmem:[%s1 + $0x68] sm:$0xff]
    %v42 = vld [vmem:[%s1 + $0x70] sm:$0xff]
    %v43 = vld [vmem:[%s1 + $0x78] sm:$0xff]
    %v44 = vld [vmem:[%s1 + $0x80] sm:$0xff]
    %v45 = vld [vmem:[%s1 + $0x88] sm:$0xff]
    %v46 = vld [vmem:[%s1 + $0x90] sm:$0xff]
    %v47 = vld [vmem:[%s1 + $0x98] sm:$0xff]
    %v48 = vld [vmem:[%s1 + $0xa0] sm:$0xff]
    %v49 = vld [vmem:[%s1 + $0xa8] sm:$0xff]
    %v50 = vld [vmem:[%s1 + $0xb0] sm:$0xff]
    %v51 = vld [vmem:[%s1 + $0xb8] sm:$0xff]
    %v52 = vld [vmem:[%s1 + $0xc0] sm:$0xff]
    %v53 = vld [vmem:[%s1 + $0xc8] sm:$0xff]
    %v54 = vld [vmem:[%s1 + $0xd0] sm:$0xff]
    %v55 = vld [vmem:[%s1 + $0xd8] sm:$0xff]
    %v56 = vld [vmem:[%s1 + $0xe0] sm:$0xff]
    %v57 = vld [vmem:[%s1 + $0xe8] sm:$0xff]
    %v58 = vld [vmem:[%s1 + $0xf0] sm:$0xff]
    %v59 = vld [vmem:[%s1 + $0xf8] sm:$0xff]
    %v60 = vld [vmem:[%s1 + $0x100] sm:$0xff]
    %v61 = vld [vmem:[%s1 + $0x108] sm:$0xff]
    %v62 = vld [vmem:[%s1 + $0x110] sm:$0xff]
    %v63 = vld [vmem:[%s1 + $0x118] sm:$0xff]
    %v64 = vld [vmem:[%s1 + $0x120] sm:$0xff]
    %v65 = vld [vmem:[%s1 + $0x128] sm:$0xff]
    %v66 = vld [vmem:[%s1 + $0x130] sm:$0xff]
    %v67 = vld [vmem:[%s1 + $0x138] sm:$0xff]
    %v68 = vld [vmem:[%s1 + $0x140] sm:$0xff]
    %v69 = vld [vmem:[%s1 + $0x148] sm:$0xff]
    %v70 = vld [vmem:[%s1 + $0x150] sm:$0xff]
    %v71 = vld [vmem:[%s1 + $0x158] sm:$0xff]
    %v72 = vld [vmem:[%s1 + $0x160] sm:$0xff]
    %v73 = vld [vmem:[%s1 + $0x168] sm:$0xff]
    %v74 = vld [vmem:[%s1 + $0x170] sm:$0xff]
    %v75 = vld [vmem:[%s1 + $0x178] sm:$0xff]
    %v76 = vld [vmem:[%s1 + $0x180] sm:$0xff]
    %v77 = vld [vmem:[%s1 + $0x188] sm:$0xff]
    %v78 = vld [vmem:[%s1 + $0x190] sm:$0xff]
    %v79 = vld [vmem:[%s1 + $0x198] sm:$0xff]
    %v80 = vld [vmem:[%s1 + $0x1a0] sm:$0xff]
    %v81 = vld [vmem:[%s1 + $0x1a8] sm:$0xff]
    %v82 = vld [vmem:[%s1 + $0x1b0] sm:$0xff]
    %v83 = vld [vmem:[%s1 + $0x1b8] sm:$0xff]
    %v84 = vld [vmem:[%s1 + $0x1c0] sm:$0xff]
    %v85 = vld [vmem:[%s1 + $0x1c8] sm:$0xff]
    %v86 = vld [vmem:[%s1 + $0x1d0] sm:$0xff]
    %v87 = vld [vmem:[%s1 + $0x1d8] sm:$0xff]
    %v88 = vld [vmem:[%s1 + $0x1e0] sm:$0xff]
    %v89 = vld [vmem:[%s1 + $0x1e8] sm:$0xff]
    %v90 = vld [vmem:[%s1 + $0x1f0] sm:$0xff]
    %v91 = vld [vmem:[%s1 + $0x1f8] sm:$0xff]
    %v92 = vld [vmem:[%s1 + $0x200] sm:$0xff]
    %v93 = vld [vmem:[%s1 + $0x208] sm:$0xff]
    %v94 = vld [vmem:[%s1 + $0x210] sm:$0xff]
    %v95 = vld [vmem:[%s1 + $0x218] sm:$0xff]
    %v96 = vld [vmem:[%s1 + $0x220] sm:$0xff]
    %v97 = vld [vmem:[%s1 + $0x228] sm:$0xff]
    %v98 = vld [vmem:[%s1 + $0x230] sm:$0xff]
    %v99 = vld [vmem:[%s1 + $0x238] sm:$0xff]
    %v100 = vld [vmem:[%s1 + $0x240] sm:$0xff]
    %v101 = vld [vmem:[%s1 + $0x248] sm:$0xff]
    %v102 = vld [vmem:[%s1 + $0x250] sm:$0xff]
    %v103 = vld [vmem:[%s1 + $0x258] sm:$0xff]
    %v104 = vld [vmem:[%s1 + $0x260] sm:$0xff]
    %v105 = vld [vmem:[%s1 + $0x268] sm:$0xff]
    %v106 = vld [vmem:[%s1 + $0x270] sm:$0xff]
    %v107 = vld [vmem:[%s1 + $0x278] sm:$0xff]
    %v108 = vld [vmem:[%s1 + $0x280] sm:$0xff]
    %v109 = vld [vmem:[%s1 + $0x288] sm:$0xff]
    %v110 = vld [vmem:[%s1 + $0x290] sm:$0xff]
    %v111 = vld [vmem:[%s1 + $0x298] sm:$0xff]
    %v112 = vld [vmem:[%s1 + $0x2a0] sm:$0xff]
    %v113 = vld [vmem:[%s1 + $0x2a8] sm:$0xff]
    %v114 = vld [vmem:[%s1 + $0x2b0] sm:$0xff]
    %v115 = vld [vmem:[%s1 + $0x2b8] sm:$0xff]
    %v116 = vld [vmem:[%s1 + $0x2c0] sm:$0xff]
    %v117 = vld [vmem:[%s1 + $0x2c8] sm:$0xff]
    %v118 = vld [vmem:[%s1 + $0x2d0] sm:$0xff]
    %v119 = vld [vmem:[%s1 + $0x2d8] sm:$0xff]
    %v120 = vld [vmem:[%s1 + $0x2e0] sm:$0xff]
    %v121 = vld [vmem:[%s1 + $0x2e8] sm:$0xff]
    %v122 = vld [vmem:[%s1 + $0x2f0] sm:$0xff]
    %v123 = vld [vmem:[%s1 + $0x2f8] sm:$0xff]
    %v124 = vld [vmem:[%s1 + $0x300] sm:$0xff]
    %v125 = vld [vmem:[%s1 + $0x308] sm:$0xff]
    %v126 = vld [vmem:[%s1 + $0x310] sm:$0xff]
    %v127 = vld [vmem:[%s1 + $0x318] sm:$0xff]
    %v128 = vld [vmem:[%s1 + $0x320] sm:$0xff]
    %v129 = vld [vmem:[%s1 + $0x328] sm:$0xff]
    %v130 = vld [vmem:[%s1 + $0x330] sm:$0xff]
    %v131 = vld [vmem:[%s1 + $0x338] sm:$0xff]
    %v132 = vld [vmem:[%s1 + $0x340] sm:$0xff]
    %v133 = vld [vmem:[%s1 + $0x348] sm:$0xff]
    %v134 = vld [vmem:[%s1 + $0x350] sm:$0xff]
    %v135 = vld [vmem:[%s1 + $0x358] sm:$0xff]
    %v136 = vld [vmem:[%s1 + $0x360] sm:$0xff]
    %v137 = vld [vmem:[%s1 + $0x368] sm:$0xff]
    %v138 = vld [vmem:[%s1 + $0x370] sm:$0xff]
    %v139 = vld [vmem:[%s1 + $0x378] sm:$0xff]
    %v140 = vld [vmem:[%s1 + $0x380] sm:$0xff]
    %v141 = vld [vmem:[%s1 + $0x388] sm:$0xff]
    %v142 = vld [vmem:[%s1 + $0x390] sm:$0xff]
    %v143 = vld [vmem:[%s1 + $0x398] sm:$0xff]
    %v144 = vld [vmem:[%s1 + $0x3a0] sm:$0xff]
    %v145 = vld [vmem:[%s1 + $0x3a8] sm:$0xff]
    %v146 = vld [vmem:[%s1 + $0x3b0] sm:$0xff]
    %v147 = vld [vmem:[%s1 + $0x3b8] sm:$0xff]
    %v148 = vld [vmem:[%s1 + $0x3c0] sm:$0xff]
    %v149 = vld [vmem:[%s1 + $0x3c8] sm:$0xff]
    %v150 = vld [vmem:[%s1 + $0x3d0] sm:$0xff]
    %v151 = vld [vmem:[%s1 + $0x3d8] sm:$0xff]
    %v152 = vld [vmem:[%s1 + $0x3e0] sm:$0xff]
    %v153 = vld [vmem:[%s1 + $0x3e8] sm:$0xff]
    %v154 = vld [vmem:[%s1 + $0x3f0] sm:$0xff]
    %v155 = vld [vmem:[%s1 + $0x3f8] sm:$0xff]
    %v156 = vld [vmem:[%s1 + $0x400] sm:$0xff]
    %v157 = vld [vmem:[%s1 + $0x408] sm:$0xff]
    %v158 = vld [vmem:[%s1 + $0x410] sm:$0xff]
    %v159 = vld [vmem:[%s1 + $0x418] sm:$0xff]
    %v160 = vld [vmem:[%s1 + $0x420] sm:$0xff]
    %v161 = vld [vmem:[%s1 + $0x428] sm:$0xff]
    %v162 = vld [vmem:[%s1 + $0x430] sm:$0xff]
    %v163 = vld [vmem:[%s1 + $0x438] sm:$0xff]
    %v164 = vld [vmem:[%s1 + $0x440] sm:$0xff]
    %v165 = vld [vmem:[%s1 + $0x448] sm:$0xff]
    %v166 = vld [vmem:[%s1 + $0x450] sm:$0xff]
    %v167 = vld [vmem:[%s1 + $0x458] sm:$0xff]
    %v168 = vld [vmem:[%s1 + $0x460] sm:$0xff]
    %v169 = vld [vmem:[%s1 + $0x468] sm:$0xff]
    %v170 = vld [vmem:[%s1 + $0x470] sm:$0xff]
    %v171 = vld [vmem:[%s1 + $0x478] sm:$0xff]
    %v172 = vunpack.c.l.s8.bf16 %v28
    %v173 = vunpack.c.l.s8.bf16 %v29
    %v174 = vunpack.c.l.s8.bf16 %v30
    %v175 = vunpack.c.l.s8.bf16 %v31
    %v176 = vunpack.c.l.s8.bf16 %v32
    %v177 = vunpack.c.l.s8.bf16 %v33
    %v178 = vunpack.c.h.s8.bf16 %v28
    %v179 = vunpack.c.h.s8.bf16 %v29
    %v180 = vunpack.c.h.s8.bf16 %v30
    %v181 = vunpack.c.h.s8.bf16 %v31
    %v182 = vunpack.c.h.s8.bf16 %v32
    %v183 = vunpack.c.h.s8.bf16 %v33
    %v184 = vunpack.c.l.s8.bf16 %v34
    %v185 = vunpack.c.l.s8.bf16 %v35
    %v186 = vunpack.c.l.s8.bf16 %v36
    %v187 = vunpack.c.l.s8.bf16 %v37
    %v188 = vunpack.c.l.s8.bf16 %v38
    %v189 = vunpack.c.l.s8.bf16 %v39
    %v190 = vunpack.c.h.s8.bf16 %v34
    %v191 = vunpack.c.h.s8.bf16 %v35
    %v192 = vunpack.c.h.s8.bf16 %v36
    %v193 = vunpack.c.h.s8.bf16 %v37
    %v194 = vunpack.c.h.s8.bf16 %v38
    %v195 = vunpack.c.h.s8.bf16 %v39
    %v196 = vunpack.c.l.s8.bf16 %v40
    %v197 = vunpack.c.l.s8.bf16 %v41
    %v198 = vunpack.c.l.s8.bf16 %v42
    %v199 = vunpack.c.l.s8.bf16 %v43
    %v200 = vunpack.c.l.s8.bf16 %v44
    %v201 = vunpack.c.l.s8.bf16 %v45
    %v202 = vunpack.c.h.s8.bf16 %v40
    %v203 = vunpack.c.h.s8.bf16 %v41
    %v204 = vunpack.c.h.s8.bf16 %v42
    %v205 = vunpack.c.h.s8.bf16 %v43
    %v206 = vunpack.c.h.s8.bf16 %v44
    %v207 = vunpack.c.h.s8.bf16 %v45
    %v208 = vunpack.c.l.s8.bf16 %v46
    %v209 = vunpack.c.l.s8.bf16 %v47
    %v210 = vunpack.c.l.s8.bf16 %v48
    %v211 = vunpack.c.l.s8.bf16 %v49
    %v212 = vunpack.c.l.s8.bf16 %v50
    %v213 = vunpack.c.l.s8.bf16 %v51
    %v214 = vunpack.c.h.s8.bf16 %v46
    %v215 = vunpack.c.h.s8.bf16 %v47
    %v216 = vunpack.c.h.s8.bf16 %v48
    %v217 = vunpack.c.h.s8.bf16 %v49
    %v218 = vunpack.c.h.s8.bf16 %v50
    %v219 = vunpack.c.h.s8.bf16 %v51
    %v220 = vunpack.c.l.s8.bf16 %v52
    %v221 = vunpack.c.l.s8.bf16 %v53
    %v222 = vunpack.c.l.s8.bf16 %v54
    %v223 = vunpack.c.l.s8.bf16 %v55
    %v224 = vunpack.c.l.s8.bf16 %v56
    %v225 = vunpack.c.l.s8.bf16 %v57
    %v226 = vunpack.c.h.s8.bf16 %v52
    %v227 = vunpack.c.h.s8.bf16 %v53
    %v228 = vunpack.c.h.s8.bf16 %v54
    %v229 = vunpack.c.h.s8.bf16 %v55
    %v230 = vunpack.c.h.s8.bf16 %v56
    %v231 = vunpack.c.h.s8.bf16 %v57
    %v232 = vunpack.c.l.s8.bf16 %v58
    %v233 = vunpack.c.l.s8.bf16 %v59
    %v234 = vunpack.c.l.s8.bf16 %v60
    %v235 = vunpack.c.l.s8.bf16 %v61
    %v236 = vunpack.c.l.s8.bf16 %v62
    %v237 = vunpack.c.l.s8.bf16 %v63
    %v238 = vunpack.c.h.s8.bf16 %v58
    %v239 = vunpack.c.h.s8.bf16 %v59
    %v240 = vunpack.c.h.s8.bf16 %v60
    %v241 = vunpack.c.h.s8.bf16 %v61
    %v242 = vunpack.c.h.s8.bf16 %v62
    %v243 = vunpack.c.h.s8.bf16 %v63
    %v244 = vunpack.c.l.s8.bf16 %v64
    %v245 = vunpack.c.l.s8.bf16 %v65
    %v246 = vunpack.c.l.s8.bf16 %v66
    %v247 = vunpack.c.l.s8.bf16 %v67
    %v248 = vunpack.c.l.s8.bf16 %v68
    %v249 = vunpack.c.l.s8.bf16 %v69
    %v250 = vunpack.c.h.s8.bf16 %v64
    %v251 = vunpack.c.h.s8.bf16 %v65
    %v252 = vunpack.c.h.s8.bf16 %v66
    %v253 = vunpack.c.h.s8.bf16 %v67
    %v254 = vunpack.c.h.s8.bf16 %v68
    %v255 = vunpack.c.h.s8.bf16 %v69
    %v256 = vunpack.c.l.s8.bf16 %v70
    %v257 = vunpack.c.l.s8.bf16 %v71
    %v258 = vunpack.c.l.s8.bf16 %v72
    %v259 = vunpack.c.l.s8.bf16 %v73
    %v260 = vunpack.c.l.s8.bf16 %v74
    %v261 = vunpack.c.l.s8.bf16 %v75
    %v262 = vunpack.c.h.s8.bf16 %v70
    %v263 = vunpack.c.h.s8.bf16 %v71
    %v264 = vunpack.c.h.s8.bf16 %v72
    %v265 = vunpack.c.h.s8.bf16 %v73
    %v266 = vunpack.c.h.s8.bf16 %v74
    %v267 = vunpack.c.h.s8.bf16 %v75
    %v268 = vunpack.c.l.s8.bf16 %v76
    %v269 = vunpack.c.l.s8.bf16 %v77
    %v270 = vunpack.c.l.s8.bf16 %v78
    %v271 = vunpack.c.l.s8.bf16 %v79
    %v272 = vunpack.c.l.s8.bf16 %v80
    %v273 = vunpack.c.l.s8.bf16 %v81
    %v274 = vunpack.c.h.s8.bf16 %v76
    %v275 = vunpack.c.h.s8.bf16 %v77
    %v276 = vunpack.c.h.s8.bf16 %v78
    %v277 = vunpack.c.h.s8.bf16 %v79
    %v278 = vunpack.c.h.s8.bf16 %v80
    %v279 = vunpack.c.h.s8.bf16 %v81
    %v280 = vunpack.c.l.s8.bf16 %v82
    %v281 = vunpack.c.l.s8.bf16 %v83
    %v282 = vunpack.c.l.s8.bf16 %v84
    %v283 = vunpack.c.l.s8.bf16 %v85
    %v284 = vunpack.c.l.s8.bf16 %v86
    %v285 = vunpack.c.l.s8.bf16 %v87
    %v286 = vunpack.c.h.s8.bf16 %v82
    %v287 = vunpack.c.h.s8.bf16 %v83
    %v288 = vunpack.c.h.s8.bf16 %v84
    %v289 = vunpack.c.h.s8.bf16 %v85
    %v290 = vunpack.c.h.s8.bf16 %v86
    %v291 = vunpack.c.h.s8.bf16 %v87
    %v292 = vunpack.c.l.s8.bf16 %v88
    %v293 = vunpack.c.l.s8.bf16 %v89
    %v294 = vunpack.c.l.s8.bf16 %v90
    %v295 = vunpack.c.l.s8.bf16 %v91
    %v296 = vunpack.c.l.s8.bf16 %v92
    %v297 = vunpack.c.l.s8.bf16 %v93
    %v298 = vunpack.c.h.s8.bf16 %v88
    %v299 = vunpack.c.h.s8.bf16 %v89
    %v300 = vunpack.c.h.s8.bf16 %v90
    %v301 = vunpack.c.h.s8.bf16 %v91
    %v302 = vunpack.c.h.s8.bf16 %v92
    %v303 = vunpack.c.h.s8.bf16 %v93
    %v304 = vunpack.c.l.s8.bf16 %v94
    %v305 = vunpack.c.l.s8.bf16 %v95
    %v306 = vunpack.c.l.s8.bf16 %v96
    %v307 = vunpack.c.l.s8.bf16 %v97
    %v308 = vunpack.c.l.s8.bf16 %v98
    %v309 = vunpack.c.l.s8.bf16 %v99
    %v310 = vunpack.c.h.s8.bf16 %v94
    %v311 = vunpack.c.h.s8.bf16 %v95
    %v312 = vunpack.c.h.s8.bf16 %v96
    %v313 = vunpack.c.h.s8.bf16 %v97
    %v314 = vunpack.c.h.s8.bf16 %v98
    %v315 = vunpack.c.h.s8.bf16 %v99
    %v316 = vunpack.c.l.s8.bf16 %v100
    %v317 = vunpack.c.l.s8.bf16 %v101
    %v318 = vunpack.c.l.s8.bf16 %v102
    %v319 = vunpack.c.l.s8.bf16 %v103
    %v320 = vunpack.c.l.s8.bf16 %v104
    %v321 = vunpack.c.l.s8.bf16 %v105
    %v322 = vunpack.c.h.s8.bf16 %v100
    %v323 = vunpack.c.h.s8.bf16 %v101
    %v324 = vunpack.c.h.s8.bf16 %v102
    %v325 = vunpack.c.h.s8.bf16 %v103
    %v326 = vunpack.c.h.s8.bf16 %v104
    %v327 = vunpack.c.h.s8.bf16 %v105
    %v328 = vunpack.c.l.s8.bf16 %v106
    %v329 = vunpack.c.l.s8.bf16 %v107
    %v330 = vunpack.c.l.s8.bf16 %v108
    %v331 = vunpack.c.l.s8.bf16 %v109
    %v332 = vunpack.c.l.s8.bf16 %v110
    %v333 = vunpack.c.l.s8.bf16 %v111
    %v334 = vunpack.c.h.s8.bf16 %v106
    %v335 = vunpack.c.h.s8.bf16 %v107
    %v336 = vunpack.c.h.s8.bf16 %v108
    %v337 = vunpack.c.h.s8.bf16 %v109
    %v338 = vunpack.c.h.s8.bf16 %v110
    %v339 = vunpack.c.h.s8.bf16 %v111
    %v340 = vunpack.c.l.s8.bf16 %v112
    %v341 = vunpack.c.l.s8.bf16 %v113
    %v342 = vunpack.c.l.s8.bf16 %v114
    %v343 = vunpack.c.l.s8.bf16 %v115
    %v344 = vunpack.c.l.s8.bf16 %v116
    %v345 = vunpack.c.l.s8.bf16 %v117
    %v346 = vunpack.c.h.s8.bf16 %v112
    %v347 = vunpack.c.h.s8.bf16 %v113
    %v348 = vunpack.c.h.s8.bf16 %v114
    %v349 = vunpack.c.h.s8.bf16 %v115
    %v350 = vunpack.c.h.s8.bf16 %v116
    %v351 = vunpack.c.h.s8.bf16 %v117
    %v352 = vunpack.c.l.s8.bf16 %v118
    %v353 = vunpack.c.l.s8.bf16 %v119
    %v354 = vunpack.c.l.s8.bf16 %v120
    %v355 = vunpack.c.l.s8.bf16 %v121
    %v356 = vunpack.c.l.s8.bf16 %v122
    %v357 = vunpack.c.l.s8.bf16 %v123
    %v358 = vunpack.c.h.s8.bf16 %v118
    %v359 = vunpack.c.h.s8.bf16 %v119
    %v360 = vunpack.c.h.s8.bf16 %v120
    %v361 = vunpack.c.h.s8.bf16 %v121
    %v362 = vunpack.c.h.s8.bf16 %v122
    %v363 = vunpack.c.h.s8.bf16 %v123
    %v364 = vunpack.c.l.s8.bf16 %v124
    %v365 = vunpack.c.l.s8.bf16 %v125
    %v366 = vunpack.c.l.s8.bf16 %v126
    %v367 = vunpack.c.l.s8.bf16 %v127
    %v368 = vunpack.c.l.s8.bf16 %v128
    %v369 = vunpack.c.l.s8.bf16 %v129
    %v370 = vunpack.c.h.s8.bf16 %v124
    %v371 = vunpack.c.h.s8.bf16 %v125
    %v372 = vunpack.c.h.s8.bf16 %v126
    %v373 = vunpack.c.h.s8.bf16 %v127
    %v374 = vunpack.c.h.s8.bf16 %v128
    %v375 = vunpack.c.h.s8.bf16 %v129
    %v376 = vunpack.c.l.s8.bf16 %v130
    %v377 = vunpack.c.l.s8.bf16 %v131
    %v378 = vunpack.c.l.s8.bf16 %v132
    %v379 = vunpack.c.l.s8.bf16 %v133
    %v380 = vunpack.c.l.s8.bf16 %v134
    %v381 = vunpack.c.l.s8.bf16 %v135
    %v382 = vunpack.c.h.s8.bf16 %v130
    %v383 = vunpack.c.h.s8.bf16 %v131
    %v384 = vunpack.c.h.s8.bf16 %v132
    %v385 = vunpack.c.h.s8.bf16 %v133
    %v386 = vunpack.c.h.s8.bf16 %v134
    %v387 = vunpack.c.h.s8.bf16 %v135
    %v388 = vunpack.c.l.s8.bf16 %v136
    %v389 = vunpack.c.l.s8.bf16 %v137
    %v390 = vunpack.c.l.s8.bf16 %v138
    %v391 = vunpack.c.l.s8.bf16 %v139
    %v392 = vunpack.c.l.s8.bf16 %v140
    %v393 = vunpack.c.l.s8.bf16 %v141
    %v394 = vunpack.c.h.s8.bf16 %v136
    %v395 = vunpack.c.h.s8.bf16 %v137
    %v396 = vunpack.c.h.s8.bf16 %v138
    %v397 = vunpack.c.h.s8.bf16 %v139
    %v398 = vunpack.c.h.s8.bf16 %v140
    %v399 = vunpack.c.h.s8.bf16 %v141
    %v400 = vunpack.c.l.s8.bf16 %v142
    %v401 = vunpack.c.l.s8.bf16 %v143
    %v402 = vunpack.c.l.s8.bf16 %v144
    %v403 = vunpack.c.l.s8.bf16 %v145
    %v404 = vunpack.c.l.s8.bf16 %v146
    %v405 = vunpack.c.l.s8.bf16 %v147
    %v406 = vunpack.c.h.s8.bf16 %v142
    %v407 = vunpack.c.h.s8.bf16 %v143
    %v408 = vunpack.c.h.s8.bf16 %v144
    %v409 = vunpack.c.h.s8.bf16 %v145
    %v410 = vunpack.c.h.s8.bf16 %v146
    %v411 = vunpack.c.h.s8.bf16 %v147
    %v412 = vunpack.c.l.s8.bf16 %v148
    %v413 = vunpack.c.l.s8.bf16 %v149
    %v414 = vunpack.c.l.s8.bf16 %v150
    %v415 = vunpack.c.l.s8.bf16 %v151
    %v416 = vunpack.c.l.s8.bf16 %v152
    %v417 = vunpack.c.l.s8.bf16 %v153
    %v418 = vunpack.c.h.s8.bf16 %v148
    %v419 = vunpack.c.h.s8.bf16 %v149
    %v420 = vunpack.c.h.s8.bf16 %v150
    %v421 = vunpack.c.h.s8.bf16 %v151
    %v422 = vunpack.c.h.s8.bf16 %v152
    %v423 = vunpack.c.h.s8.bf16 %v153
    %v424 = vunpack.c.l.s8.bf16 %v154
    %v425 = vunpack.c.l.s8.bf16 %v155
    %v426 = vunpack.c.l.s8.bf16 %v156
    %v427 = vunpack.c.l.s8.bf16 %v157
    %v428 = vunpack.c.l.s8.bf16 %v158
    %v429 = vunpack.c.l.s8.bf16 %v159
    %v430 = vunpack.c.h.s8.bf16 %v154
    %v431 = vunpack.c.h.s8.bf16 %v155
    %v432 = vunpack.c.h.s8.bf16 %v156
    %v433 = vunpack.c.h.s8.bf16 %v157
    %v434 = vunpack.c.h.s8.bf16 %v158
    %v435 = vunpack.c.h.s8.bf16 %v159
    %v436 = vunpack.c.l.s8.bf16 %v160
    %v437 = vunpack.c.l.s8.bf16 %v161
    %v438 = vunpack.c.l.s8.bf16 %v162
    %v439 = vunpack.c.l.s8.bf16 %v163
    %v440 = vunpack.c.l.s8.bf16 %v164
    %v441 = vunpack.c.l.s8.bf16 %v165
    %v442 = vunpack.c.h.s8.bf16 %v160
    %v443 = vunpack.c.h.s8.bf16 %v161
    %v444 = vunpack.c.h.s8.bf16 %v162
    %v445 = vunpack.c.h.s8.bf16 %v163
    %v446 = vunpack.c.h.s8.bf16 %v164
    %v447 = vunpack.c.h.s8.bf16 %v165
    %v448 = vunpack.c.l.s8.bf16 %v166
    %v449 = vunpack.c.l.s8.bf16 %v167
    %v450 = vunpack.c.l.s8.bf16 %v168
    %v451 = vunpack.c.l.s8.bf16 %v169
    %v452 = vunpack.c.l.s8.bf16 %v170
    %v453 = vunpack.c.l.s8.bf16 %v171
    %v454 = vunpack.c.h.s8.bf16 %v166
    %v455 = vunpack.c.h.s8.bf16 %v167
    %v456 = vunpack.c.h.s8.bf16 %v168
    %v457 = vunpack.c.h.s8.bf16 %v169
    %v458 = vunpack.c.h.s8.bf16 %v170
    %v459 = vunpack.c.h.s8.bf16 %v171
    %v463 = vunpack.c.l.b16 %v25
    %v464 = vunpack.c.h.b16 %v25
    %v465 = vunpack.c.l.b16 %v26
    %v466 = vunpack.c.h.b16 %v26
    %v467 = vunpack.c.l.b16 %v27
    %v468 = vunpack.c.h.b16 %v27
    %v469 = vpack.c.b16 %v463, %v463
    %v470 = vpack.c.b16 %v464, %v464
    %v471 = vpack.c.b16 %v465, %v465
    %v472 = vpack.c.b16 %v466, %v466
    %v473 = vpack.c.b16 %v467, %v467
    %v474 = vpack.c.b16 %v468, %v468
    %481 = vmatprep.subr.bf16.mxu0 %v215
    %482 = vmatpush1.bf16.msra.mxu0 %v214
    %483 = vmatprep.subr.bf16.mxu0 %v209
    %484 = vmatpush1.bf16.msra.mxu0 %v208
    %485 = vmatprep.subr.bf16.mxu0 %v203
    %486 = vmatpush1.bf16.msra.mxu0 %v202
    %487 = vmatprep.subr.bf16.mxu0 %v197
    %488 = vmatpush1.bf16.msra.mxu0 %v196
    %489 = vmatprep.subr.bf16.mxu0 %v191
    %490 = vmatpush1.bf16.msra.mxu0 %v190
    %491 = vmatprep.subr.bf16.mxu0 %v185
    %492 = vmatpush1.bf16.msra.mxu0 %v184
    %493 = vmatprep.subr.bf16.mxu0 %v179
    %494 = vmatpush1.bf16.msra.mxu0 %v178
    %495 = vmatprep.subr.bf16.mxu0 %v173
    %496 = vmatpush1.bf16.msra.mxu0 %v172
    %497 = vmatprep.subr.bf16.mxu0 %v263
    %498 = vmatpush2.bf16.msra.mxu0 %v262
    %499 = vmatprep.subr.bf16.mxu0 %v257
    %500 = vmatpush2.bf16.msra.mxu0 %v256
    %501 = vmatprep.subr.bf16.mxu0 %v251
    %502 = vmatpush2.bf16.msra.mxu0 %v250
    %503 = vmatprep.subr.bf16.mxu0 %v245
    %504 = vmatpush2.bf16.msra.mxu0 %v244
    %505 = vmatprep.subr.bf16.mxu0 %v239
    %506 = vmatpush2.bf16.msra.mxu0 %v238
    %507 = vmatprep.subr.bf16.mxu0 %v233
    %508 = vmatpush2.bf16.msra.mxu0 %v232
    %509 = vmatprep.subr.bf16.mxu0 %v227
    %510 = vmatpush2.bf16.msra.mxu0 %v226
    %511 = vmatprep.subr.bf16.mxu0 %v221
    %512 = vmatpush2.bf16.msra.mxu0 %v220
    %513 = vmatprep.mubr.bf16.mxu0 %v470
    %514 = vmatmul.mubr.bf16.gmra.mxu0 %v469
    %v515 = vpop.f32.mrf.mxu0
    %v516 = vadd.f32 0.0, %v515
    %v517 = vpop.f32.mrf.mxu0
    %v518 = vadd.f32 0.0, %v517
    %v519 = vpop.f32.mrf.mxu0
    %v520 = vpop.f32.mrf.mxu0
    %521 = vdwg.mxu0
    %522 = vmatprep.subr.bf16.mxu0 %v311
    %523 = vmatpush1.bf16.msra.mxu0 %v310
    %524 = vmatprep.subr.bf16.mxu0 %v305
    %525 = vmatpush1.bf16.msra.mxu0 %v304
    %526 = vmatprep.subr.bf16.mxu0 %v299
    %527 = vmatpush1.bf16.msra.mxu0 %v298
    %528 = vmatprep.subr.bf16.mxu0 %v293
    %529 = vmatpush1.bf16.msra.mxu0 %v292
    %530 = vmatprep.subr.bf16.mxu0 %v287
    %531 = vmatpush1.bf16.msra.mxu0 %v286
    %532 = vmatprep.subr.bf16.mxu0 %v281
    %533 = vmatpush1.bf16.msra.mxu0 %v280
    %534 = vmatprep.subr.bf16.mxu0 %v275
    %535 = vmatpush1.bf16.msra.mxu0 %v274
    %536 = vmatprep.subr.bf16.mxu0 %v269
    %537 = vmatpush1.bf16.msra.mxu0 %v268
    %538 = vmatprep.subr.bf16.mxu0 %v359
    %539 = vmatpush2.bf16.msra.mxu0 %v358
    %540 = vmatprep.subr.bf16.mxu0 %v353
    %541 = vmatpush2.bf16.msra.mxu0 %v352
    %542 = vmatprep.subr.bf16.mxu0 %v347
    %543 = vmatpush2.bf16.msra.mxu0 %v346
    %544 = vmatprep.subr.bf16.mxu0 %v341
    %545 = vmatpush2.bf16.msra.mxu0 %v340
    %546 = vmatprep.subr.bf16.mxu0 %v335
    %547 = vmatpush2.bf16.msra.mxu0 %v334
    %548 = vmatprep.subr.bf16.mxu0 %v329
    %549 = vmatpush2.bf16.msra.mxu0 %v328
    %550 = vmatprep.subr.bf16.mxu0 %v323
    %551 = vmatpush2.bf16.msra.mxu0 %v322
    %552 = vmatprep.subr.bf16.mxu0 %v317
    %553 = vmatpush2.bf16.msra.mxu0 %v316
    %554 = vmatprep.mubr.bf16.mxu0 %v472
    %555 = vmatmul.mubr.bf16.gmra.mxu0 %v471
    %v556 = vpop.f32.mrf.mxu0
    %v557 = vadd.f32 %v516, %v556
    %v558 = vpop.f32.mrf.mxu0
    %v559 = vadd.f32 %v518, %v558
    %v560 = vpop.f32.mrf.mxu0
    %v561 = vpop.f32.mrf.mxu0
    %562 = vdwg.mxu0
    %563 = vmatprep.subr.bf16.mxu0 %v407
    %564 = vmatpush1.bf16.msra.mxu0 %v406
    %565 = vmatprep.subr.bf16.mxu0 %v401
    %566 = vmatpush1.bf16.msra.mxu0 %v400
    %567 = vmatprep.subr.bf16.mxu0 %v395
    %568 = vmatpush1.bf16.msra.mxu0 %v394
    %569 = vmatprep.subr.bf16.mxu0 %v389
    %570 = vmatpush1.bf16.msra.mxu0 %v388
    %571 = vmatprep.subr.bf16.mxu0 %v383
    %572 = vmatpush1.bf16.msra.mxu0 %v382
    %573 = vmatprep.subr.bf16.mxu0 %v377
    %574 = vmatpush1.bf16.msra.mxu0 %v376
    %575 = vmatprep.subr.bf16.mxu0 %v371
    %576 = vmatpush1.bf16.msra.mxu0 %v370
    %577 = vmatprep.subr.bf16.mxu0 %v365
    %578 = vmatpush1.bf16.msra.mxu0 %v364
    %579 = vmatprep.subr.bf16.mxu0 %v455
    %580 = vmatpush2.bf16.msra.mxu0 %v454
    %581 = vmatprep.subr.bf16.mxu0 %v449
    %582 = vmatpush2.bf16.msra.mxu0 %v448
    %583 = vmatprep.subr.bf16.mxu0 %v443
    %584 = vmatpush2.bf16.msra.mxu0 %v442
    %585 = vmatprep.subr.bf16.mxu0 %v437
    %586 = vmatpush2.bf16.msra.mxu0 %v436
    %587 = vmatprep.subr.bf16.mxu0 %v431
    %588 = vmatpush2.bf16.msra.mxu0 %v430
    %589 = vmatprep.subr.bf16.mxu0 %v425
    %590 = vmatpush2.bf16.msra.mxu0 %v424
    %591 = vmatprep.subr.bf16.mxu0 %v419
    %592 = vmatpush2.bf16.msra.mxu0 %v418
    %593 = vmatprep.subr.bf16.mxu0 %v413
    %594 = vmatpush2.bf16.msra.mxu0 %v412
    %595 = vmatprep.mubr.bf16.mxu0 %v474
    %596 = vmatmul.mubr.bf16.gmra.mxu0 %v473
    %v597 = vpop.f32.mrf.mxu0
    %v598 = vadd.f32 %v557, %v597
    %v599 = vpop.f32.mrf.mxu0
    %v600 = vadd.f32 %v559, %v599
    %v601 = vpop.f32.mrf.mxu0
    %v602 = vpop.f32.mrf.mxu0
    %603 = vdwg.mxu0
    %604 = vmatprep.subr.bf16.mxu0 %v217
    %605 = vmatpush1.bf16.msra.mxu0 %v216
    %606 = vmatprep.subr.bf16.mxu0 %v211
    %607 = vmatpush1.bf16.msra.mxu0 %v210
    %608 = vmatprep.subr.bf16.mxu0 %v205
    %609 = vmatpush1.bf16.msra.mxu0 %v204
    %610 = vmatprep.subr.bf16.mxu0 %v199
    %611 = vmatpush1.bf16.msra.mxu0 %v198
    %612 = vmatprep.subr.bf16.mxu0 %v193
    %613 = vmatpush1.bf16.msra.mxu0 %v192
    %614 = vmatprep.subr.bf16.mxu0 %v187
    %615 = vmatpush1.bf16.msra.mxu0 %v186
    %616 = vmatprep.subr.bf16.mxu0 %v181
    %617 = vmatpush1.bf16.msra.mxu0 %v180
    %618 = vmatprep.subr.bf16.mxu0 %v175
    %619 = vmatpush1.bf16.msra.mxu0 %v174
    %620 = vmatprep.subr.bf16.mxu0 %v265
    %621 = vmatpush2.bf16.msra.mxu0 %v264
    %622 = vmatprep.subr.bf16.mxu0 %v259
    %623 = vmatpush2.bf16.msra.mxu0 %v258
    %624 = vmatprep.subr.bf16.mxu0 %v253
    %625 = vmatpush2.bf16.msra.mxu0 %v252
    %626 = vmatprep.subr.bf16.mxu0 %v247
    %627 = vmatpush2.bf16.msra.mxu0 %v246
    %628 = vmatprep.subr.bf16.mxu0 %v241
    %629 = vmatpush2.bf16.msra.mxu0 %v240
    %630 = vmatprep.subr.bf16.mxu0 %v235
    %631 = vmatpush2.bf16.msra.mxu0 %v234
    %632 = vmatprep.subr.bf16.mxu0 %v229
    %633 = vmatpush2.bf16.msra.mxu0 %v228
    %634 = vmatprep.subr.bf16.mxu0 %v223
    %635 = vmatpush2.bf16.msra.mxu0 %v222
    %636 = vmatprep.mubr.bf16.mxu0 %v470
    %637 = vmatmul.mubr.bf16.gmra.mxu0 %v469
    %v638 = vpop.f32.mrf.mxu0
    %v639 = vadd.f32 0.0, %v638
    %v640 = vpop.f32.mrf.mxu0
    %v641 = vadd.f32 0.0, %v640
    %v642 = vpop.f32.mrf.mxu0
    %v643 = vpop.f32.mrf.mxu0
    %644 = vdwg.mxu0
    %645 = vmatprep.subr.bf16.mxu0 %v313
    %646 = vmatpush1.bf16.msra.mxu0 %v312
    %647 = vmatprep.subr.bf16.mxu0 %v307
    %648 = vmatpush1.bf16.msra.mxu0 %v306
    %649 = vmatprep.subr.bf16.mxu0 %v301
    %650 = vmatpush1.bf16.msra.mxu0 %v300
    %651 = vmatprep.subr.bf16.mxu0 %v295
    %652 = vmatpush1.bf16.msra.mxu0 %v294
    %653 = vmatprep.subr.bf16.mxu0 %v289
    %654 = vmatpush1.bf16.msra.mxu0 %v288
    %655 = vmatprep.subr.bf16.mxu0 %v283
    %656 = vmatpush1.bf16.msra.mxu0 %v282
    %657 = vmatprep.subr.bf16.mxu0 %v277
    %658 = vmatpush1.bf16.msra.mxu0 %v276
    %659 = vmatprep.subr.bf16.mxu0 %v271
    %660 = vmatpush1.bf16.msra.mxu0 %v270
    %661 = vmatprep.subr.bf16.mxu0 %v361
    %662 = vmatpush2.bf16.msra.mxu0 %v360
    %663 = vmatprep.subr.bf16.mxu0 %v355
    %664 = vmatpush2.bf16.msra.mxu0 %v354
    %665 = vmatprep.subr.bf16.mxu0 %v349
    %666 = vmatpush2.bf16.msra.mxu0 %v348
    %667 = vmatprep.subr.bf16.mxu0 %v343
    %668 = vmatpush2.bf16.msra.mxu0 %v342
    %669 = vmatprep.subr.bf16.mxu0 %v337
    %670 = vmatpush2.bf16.msra.mxu0 %v336
    %671 = vmatprep.subr.bf16.mxu0 %v331
    %672 = vmatpush2.bf16.msra.mxu0 %v330
    %673 = vmatprep.subr.bf16.mxu0 %v325
    %674 = vmatpush2.bf16.msra.mxu0 %v324
    %675 = vmatprep.subr.bf16.mxu0 %v319
    %676 = vmatpush2.bf16.msra.mxu0 %v318
    %677 = vmatprep.mubr.bf16.mxu0 %v472
    %678 = vmatmul.mubr.bf16.gmra.mxu0 %v471
    %v679 = vpop.f32.mrf.mxu0
    %v680 = vadd.f32 %v639, %v679
    %v681 = vpop.f32.mrf.mxu0
    %v682 = vadd.f32 %v641, %v681
    %v683 = vpop.f32.mrf.mxu0
    %v684 = vpop.f32.mrf.mxu0
    %685 = vdwg.mxu0
    %686 = vmatprep.subr.bf16.mxu0 %v409
    %687 = vmatpush1.bf16.msra.mxu0 %v408
    %688 = vmatprep.subr.bf16.mxu0 %v403
    %689 = vmatpush1.bf16.msra.mxu0 %v402
    %690 = vmatprep.subr.bf16.mxu0 %v397
    %691 = vmatpush1.bf16.msra.mxu0 %v396
    %692 = vmatprep.subr.bf16.mxu0 %v391
    %693 = vmatpush1.bf16.msra.mxu0 %v390
    %694 = vmatprep.subr.bf16.mxu0 %v385
    %695 = vmatpush1.bf16.msra.mxu0 %v384
    %696 = vmatprep.subr.bf16.mxu0 %v379
    %697 = vmatpush1.bf16.msra.mxu0 %v378
    %698 = vmatprep.subr.bf16.mxu0 %v373
    %699 = vmatpush1.bf16.msra.mxu0 %v372
    %700 = vmatprep.subr.bf16.mxu0 %v367
    %701 = vmatpush1.bf16.msra.mxu0 %v366
    %702 = vmatprep.subr.bf16.mxu0 %v457
    %703 = vmatpush2.bf16.msra.mxu0 %v456
    %704 = vmatprep.subr.bf16.mxu0 %v451
    %705 = vmatpush2.bf16.msra.mxu0 %v450
    %706 = vmatprep.subr.bf16.mxu0 %v445
    %707 = vmatpush2.bf16.msra.mxu0 %v444
    %708 = vmatprep.subr.bf16.mxu0 %v439
    %709 = vmatpush2.bf16.msra.mxu0 %v438
    %710 = vmatprep.subr.bf16.mxu0 %v433
    %711 = vmatpush2.bf16.msra.mxu0 %v432
    %712 = vmatprep.subr.bf16.mxu0 %v427
    %713 = vmatpush2.bf16.msra.mxu0 %v426
    %714 = vmatprep.subr.bf16.mxu0 %v421
    %715 = vmatpush2.bf16.msra.mxu0 %v420
    %716 = vmatprep.subr.bf16.mxu0 %v415
    %717 = vmatpush2.bf16.msra.mxu0 %v414
    %718 = vmatprep.mubr.bf16.mxu0 %v474
    %719 = vmatmul.mubr.bf16.gmra.mxu0 %v473
    %v720 = vpop.f32.mrf.mxu0
    %v721 = vadd.f32 %v680, %v720
    %v722 = vpop.f32.mrf.mxu0
    %v723 = vadd.f32 %v682, %v722
    %v724 = vpop.f32.mrf.mxu0
    %v725 = vpop.f32.mrf.mxu0
    %726 = vdwg.mxu0
    %727 = vmatprep.subr.bf16.mxu0 %v219
    %728 = vmatpush1.bf16.msra.mxu0 %v218
    %729 = vmatprep.subr.bf16.mxu0 %v213
    %730 = vmatpush1.bf16.msra.mxu0 %v212
    %731 = vmatprep.subr.bf16.mxu0 %v207
    %732 = vmatpush1.bf16.msra.mxu0 %v206
    %733 = vmatprep.subr.bf16.mxu0 %v201
    %734 = vmatpush1.bf16.msra.mxu0 %v200
    %735 = vmatprep.subr.bf16.mxu0 %v195
    %736 = vmatpush1.bf16.msra.mxu0 %v194
    %737 = vmatprep.subr.bf16.mxu0 %v189
    %738 = vmatpush1.bf16.msra.mxu0 %v188
    %739 = vmatprep.subr.bf16.mxu0 %v183
    %740 = vmatpush1.bf16.msra.mxu0 %v182
    %741 = vmatprep.subr.bf16.mxu0 %v177
    %742 = vmatpush1.bf16.msra.mxu0 %v176
    %743 = vmatprep.subr.bf16.mxu0 %v267
    %744 = vmatpush2.bf16.msra.mxu0 %v266
    %745 = vmatprep.subr.bf16.mxu0 %v261
    %746 = vmatpush2.bf16.msra.mxu0 %v260
    %747 = vmatprep.subr.bf16.mxu0 %v255
    %748 = vmatpush2.bf16.msra.mxu0 %v254
    %749 = vmatprep.subr.bf16.mxu0 %v249
    %750 = vmatpush2.bf16.msra.mxu0 %v248
    %751 = vmatprep.subr.bf16.mxu0 %v243
    %752 = vmatpush2.bf16.msra.mxu0 %v242
    %753 = vmatprep.subr.bf16.mxu0 %v237
    %754 = vmatpush2.bf16.msra.mxu0 %v236
    %755 = vmatprep.subr.bf16.mxu0 %v231
    %756 = vmatpush2.bf16.msra.mxu0 %v230
    %757 = vmatprep.subr.bf16.mxu0 %v225
    %758 = vmatpush2.bf16.msra.mxu0 %v224
    %759 = vmatprep.mubr.bf16.mxu0 %v470
    %760 = vmatmul.mubr.bf16.gmra.mxu0 %v469
    %v761 = vpop.f32.mrf.mxu0
    %v762 = vadd.f32 0.0, %v761
    %v763 = vpop.f32.mrf.mxu0
    %v764 = vadd.f32 0.0, %v763
    %v765 = vpop.f32.mrf.mxu0
    %v766 = vpop.f32.mrf.mxu0
    %767 = vdwg.mxu0
    %768 = vmatprep.subr.bf16.mxu0 %v315
    %769 = vmatpush1.bf16.msra.mxu0 %v314
    %770 = vmatprep.subr.bf16.mxu0 %v309
    %771 = vmatpush1.bf16.msra.mxu0 %v308
    %772 = vmatprep.subr.bf16.mxu0 %v303
    %773 = vmatpush1.bf16.msra.mxu0 %v302
    %774 = vmatprep.subr.bf16.mxu0 %v297
    %775 = vmatpush1.bf16.msra.mxu0 %v296
    %776 = vmatprep.subr.bf16.mxu0 %v291
    %777 = vmatpush1.bf16.msra.mxu0 %v290
    %778 = vmatprep.subr.bf16.mxu0 %v285
    %779 = vmatpush1.bf16.msra.mxu0 %v284
    %780 = vmatprep.subr.bf16.mxu0 %v279
    %781 = vmatpush1.bf16.msra.mxu0 %v278
    %782 = vmatprep.subr.bf16.mxu0 %v273
    %783 = vmatpush1.bf16.msra.mxu0 %v272
    %784 = vmatprep.subr.bf16.mxu0 %v363
    %785 = vmatpush2.bf16.msra.mxu0 %v362
    %786 = vmatprep.subr.bf16.mxu0 %v357
    %787 = vmatpush2.bf16.msra.mxu0 %v356
    %788 = vmatprep.subr.bf16.mxu0 %v351
    %789 = vmatpush2.bf16.msra.mxu0 %v350
    %790 = vmatprep.subr.bf16.mxu0 %v345
    %791 = vmatpush2.bf16.msra.mxu0 %v344
    %792 = vmatprep.subr.bf16.mxu0 %v339
    %793 = vmatpush2.bf16.msra.mxu0 %v338
    %794 = vmatprep.subr.bf16.mxu0 %v333
    %795 = vmatpush2.bf16.msra.mxu0 %v332
    %796 = vmatprep.subr.bf16.mxu0 %v327
    %797 = vmatpush2.bf16.msra.mxu0 %v326
    %798 = vmatprep.subr.bf16.mxu0 %v321
    %799 = vmatpush2.bf16.msra.mxu0 %v320
    %800 = vmatprep.mubr.bf16.mxu0 %v472
    %801 = vmatmul.mubr.bf16.gmra.mxu0 %v471
    %v802 = vpop.f32.mrf.mxu0
    %v803 = vadd.f32 %v762, %v802
    %v804 = vpop.f32.mrf.mxu0
    %v805 = vadd.f32 %v764, %v804
    %v806 = vpop.f32.mrf.mxu0
    %v807 = vpop.f32.mrf.mxu0
    %808 = vdwg.mxu0
    %809 = vmatprep.subr.bf16.mxu0 %v411
    %810 = vmatpush1.bf16.msra.mxu0 %v410
    %811 = vmatprep.subr.bf16.mxu0 %v405
    %812 = vmatpush1.bf16.msra.mxu0 %v404
    %813 = vmatprep.subr.bf16.mxu0 %v399
    %814 = vmatpush1.bf16.msra.mxu0 %v398
    %815 = vmatprep.subr.bf16.mxu0 %v393
    %816 = vmatpush1.bf16.msra.mxu0 %v392
    %817 = vmatprep.subr.bf16.mxu0 %v387
    %818 = vmatpush1.bf16.msra.mxu0 %v386
    %819 = vmatprep.subr.bf16.mxu0 %v381
    %820 = vmatpush1.bf16.msra.mxu0 %v380
    %821 = vmatprep.subr.bf16.mxu0 %v375
    %822 = vmatpush1.bf16.msra.mxu0 %v374
    %823 = vmatprep.subr.bf16.mxu0 %v369
    %824 = vmatpush1.bf16.msra.mxu0 %v368
    %825 = vmatprep.subr.bf16.mxu0 %v459
    %826 = vmatpush2.bf16.msra.mxu0 %v458
    %827 = vmatprep.subr.bf16.mxu0 %v453
    %828 = vmatpush2.bf16.msra.mxu0 %v452
    %829 = vmatprep.subr.bf16.mxu0 %v447
    %830 = vmatpush2.bf16.msra.mxu0 %v446
    %831 = vmatprep.subr.bf16.mxu0 %v441
    %832 = vmatpush2.bf16.msra.mxu0 %v440
    %833 = vmatprep.subr.bf16.mxu0 %v435
    %834 = vmatpush2.bf16.msra.mxu0 %v434
    %835 = vmatprep.subr.bf16.mxu0 %v429
    %836 = vmatpush2.bf16.msra.mxu0 %v428
    %837 = vmatprep.subr.bf16.mxu0 %v423
    %838 = vmatpush2.bf16.msra.mxu0 %v422
    %839 = vmatprep.subr.bf16.mxu0 %v417
    %840 = vmatpush2.bf16.msra.mxu0 %v416
    %841 = vmatprep.mubr.bf16.mxu0 %v474
    %842 = vmatmul.mubr.bf16.gmra.mxu0 %v473
    %v843 = vpop.f32.mrf.mxu0
    %v844 = vadd.f32 %v803, %v843
    %v845 = vpop.f32.mrf.mxu0
    %v846 = vadd.f32 %v805, %v845
    %v847 = vpop.f32.mrf.mxu0
    %v848 = vpop.f32.mrf.mxu0
    %849 = vdwg.mxu0
    %v850 = vld [vmem:[%s2] sm:$0x3f]
    %v852 = vlaneseq
    %v853 = vshrl.u32 %v852, 7
    %v854 = vsub.s32 0, %v853
    %v855 = vrot.slane %v850, %v854
    %v856 = vlaneseq
    %v857 = vshrl.u32 %v856, 7
    %v858 = vsub.s32 1, %v857
    %v859 = vrot.slane %v850, %v858
    %v860 = vlaneseq
    %v861 = vshrl.u32 %v860, 7
    %v862 = vsub.s32 2, %v861
    %v863 = vrot.slane %v850, %v862
    %v864 = vlaneseq
    %v865 = vshrl.u32 %v864, 7
    %v866 = vsub.s32 3, %v865
    %v867 = vrot.slane %v850, %v866
    %v868 = vlaneseq
    %v869 = vshrl.u32 %v868, 7
    %v870 = vsub.s32 4, %v869
    %v871 = vrot.slane %v850, %v870
    %v872 = vlaneseq
    %v873 = vshrl.u32 %v872, 7
    %v874 = vsub.s32 5, %v873
    %v875 = vrot.slane %v850, %v874
    %v882 = vmul.f32 %v598, %v855
    %v883 = vmul.f32 %v600, %v859
    %v884 = vmul.f32 %v721, %v863
    %v885 = vmul.f32 %v723, %v867
    %v886 = vmul.f32 %v844, %v871
    %v887 = vmul.f32 %v846, %v875
    %v888 = vld [vmem:[%s3] sm:$0x3f]
    %v890 = vlaneseq
    %v891 = vshrl.u32 %v890, 7
    %v892 = vsub.s32 0, %v891
    %v893 = vrot.slane %v888, %v892
    %v894 = vlaneseq
    %v895 = vshrl.u32 %v894, 7
    %v896 = vsub.s32 1, %v895
    %v897 = vrot.slane %v888, %v896
    %v898 = vlaneseq
    %v899 = vshrl.u32 %v898, 7
    %v900 = vsub.s32 2, %v899
    %v901 = vrot.slane %v888, %v900
    %v902 = vlaneseq
    %v903 = vshrl.u32 %v902, 7
    %v904 = vsub.s32 3, %v903
    %v905 = vrot.slane %v888, %v904
    %v906 = vlaneseq
    %v907 = vshrl.u32 %v906, 7
    %v908 = vsub.s32 4, %v907
    %v909 = vrot.slane %v888, %v908
    %v910 = vlaneseq
    %v911 = vshrl.u32 %v910, 7
    %v912 = vsub.s32 5, %v911
    %v913 = vrot.slane %v888, %v912
    %v920 = vadd.f32 %v882, %v893
    %v921 = vadd.f32 %v883, %v897
    %v922 = vadd.f32 %v884, %v901
    %v923 = vadd.f32 %v885, %v905
    %v924 = vadd.f32 %v886, %v909
    %v925 = vadd.f32 %v887, %v913
    %v926 = vtanh.pop %v920
    %v927 = vtanh.pop %v921
    %v928 = vtanh.pop %v922
    %v929 = vtanh.pop %v923
    %v930 = vtanh.pop %v924
    %v931 = vtanh.pop %v925
    %v932 = vadd.f32 %v926, %v927
    %v933 = vadd.f32 %v932, %v928
    %v934 = vadd.f32 %v933, %v929
    %v935 = vadd.f32 %v934, %v930
    %v936 = vadd.f32 %v935, %v931
    %937 = vadd.xlane.f32.xlu0 %v936
    %v938 = vpop.xlane.xlu0 %937
    %v939 = vmul.f32 %v938, 0.0013020834
    %v940 = vmul.f32 %v926, %v926
    %v941 = vmul.f32 %v927, %v927
    %v942 = vmul.f32 %v928, %v928
    %v943 = vmul.f32 %v929, %v929
    %v944 = vmul.f32 %v930, %v930
    %v945 = vmul.f32 %v931, %v931
    %v946 = vadd.f32 %v940, %v941
    %v947 = vadd.f32 %v946, %v942
    %v948 = vadd.f32 %v947, %v943
    %v949 = vadd.f32 %v948, %v944
    %v950 = vadd.f32 %v949, %v945
    %951 = vadd.xlane.f32.xlu0 %v950
    %v952 = vpop.xlane.xlu0 %951
    %v953 = vmul.f32 %v952, 0.0013020834
    %v954 = vmul.f32 %v939, %v939
    %v955 = vsub.f32 %v953, %v954
    %v956 = vsub.f32 %v926, %v939
    %v957 = vsub.f32 %v927, %v939
    %v958 = vsub.f32 %v928, %v939
    %v959 = vsub.f32 %v929, %v939
    %v960 = vsub.f32 %v930, %v939
    %v961 = vsub.f32 %v931, %v939
    %v962 = vadd.f32 %v955, 1e-05
    %v963 = vrsqrt.pop %v962
    %v964 = vmul.f32 %v956, %v963
    %v965 = vmul.f32 %v957, %v963
    %v966 = vmul.f32 %v958, %v963
    %v967 = vmul.f32 %v959, %v963
    %v968 = vmul.f32 %v960, %v963
    %v969 = vmul.f32 %v961, %v963
    %v970 = vpack.c.bf16 %v964, %v964
    %v971 = vpack.c.bf16 %v965, %v965
    %v972 = vpack.c.bf16 %v966, %v966
    %v973 = vpack.c.bf16 %v967, %v967
    %v974 = vpack.c.bf16 %v968, %v968
    %v975 = vpack.c.bf16 %v969, %v969
    %v976 = vld [vmem:[%s4] sm:$0xf]
    %v977 = vld [vmem:[%s4 + $0x4] sm:$0xf]
    %v978 = vld [vmem:[%s4 + $0x8] sm:$0xf]
    %v979 = vld [vmem:[%s4 + $0xc] sm:$0xf]
    %v980 = vld [vmem:[%s4 + $0x10] sm:$0xf]
    %v981 = vld [vmem:[%s4 + $0x14] sm:$0xf]
    %v982 = vld [vmem:[%s4 + $0x18] sm:$0xf]
    %v983 = vld [vmem:[%s4 + $0x1c] sm:$0xf]
    %v984 = vld [vmem:[%s4 + $0x20] sm:$0xf]
    %v985 = vld [vmem:[%s4 + $0x24] sm:$0xf]
    %v986 = vld [vmem:[%s4 + $0x28] sm:$0xf]
    %v987 = vld [vmem:[%s4 + $0x2c] sm:$0xf]
    %v988 = vld [vmem:[%s4 + $0x30] sm:$0xf]
    %v989 = vld [vmem:[%s4 + $0x34] sm:$0xf]
    %v990 = vld [vmem:[%s4 + $0x38] sm:$0xf]
    %v991 = vld [vmem:[%s4 + $0x3c] sm:$0xf]
    %v992 = vld [vmem:[%s4 + $0x40] sm:$0xf]
    %v993 = vld [vmem:[%s4 + $0x44] sm:$0xf]
    %v994 = vld [vmem:[%s4 + $0x48] sm:$0xf]
    %v995 = vld [vmem:[%s4 + $0x4c] sm:$0xf]
    %v996 = vld [vmem:[%s4 + $0x50] sm:$0xf]
    %v997 = vld [vmem:[%s4 + $0x54] sm:$0xf]
    %v998 = vld [vmem:[%s4 + $0x58] sm:$0xf]
    %v999 = vld [vmem:[%s4 + $0x5c] sm:$0xf]
    %v1000 = vld [vmem:[%s4 + $0x60] sm:$0xf]
    %v1001 = vld [vmem:[%s4 + $0x64] sm:$0xf]
    %v1002 = vld [vmem:[%s4 + $0x68] sm:$0xf]
    %v1003 = vld [vmem:[%s4 + $0x6c] sm:$0xf]
    %v1004 = vld [vmem:[%s4 + $0x70] sm:$0xf]
    %v1005 = vld [vmem:[%s4 + $0x74] sm:$0xf]
    %v1006 = vld [vmem:[%s4 + $0x78] sm:$0xf]
    %v1007 = vld [vmem:[%s4 + $0x7c] sm:$0xf]
    %v1008 = vld [vmem:[%s4 + $0x80] sm:$0xf]
    %v1009 = vld [vmem:[%s4 + $0x84] sm:$0xf]
    %v1010 = vld [vmem:[%s4 + $0x88] sm:$0xf]
    %v1011 = vld [vmem:[%s4 + $0x8c] sm:$0xf]
    %v1012 = vld [vmem:[%s4 + $0x90] sm:$0xf]
    %v1013 = vld [vmem:[%s4 + $0x94] sm:$0xf]
    %v1014 = vld [vmem:[%s4 + $0x98] sm:$0xf]
    %v1015 = vld [vmem:[%s4 + $0x9c] sm:$0xf]
    %v1016 = vld [vmem:[%s4 + $0xa0] sm:$0xf]
    %v1017 = vld [vmem:[%s4 + $0xa4] sm:$0xf]
    %v1018 = vld [vmem:[%s4 + $0xa8] sm:$0xf]
    %v1019 = vld [vmem:[%s4 + $0xac] sm:$0xf]
    %v1020 = vld [vmem:[%s4 + $0xb0] sm:$0xf]
    %v1021 = vld [vmem:[%s4 + $0xb4] sm:$0xf]
    %v1022 = vld [vmem:[%s4 + $0xb8] sm:$0xf]
    %v1023 = vld [vmem:[%s4 + $0xbc] sm:$0xf]
    %v1024 = vld [vmem:[%s4 + $0xc0] sm:$0xf]
    %v1025 = vld [vmem:[%s4 + $0xc4] sm:$0xf]
    %v1026 = vld [vmem:[%s4 + $0xc8] sm:$0xf]
    %v1027 = vld [vmem:[%s4 + $0xcc] sm:$0xf]
    %v1028 = vld [vmem:[%s4 + $0xd0] sm:$0xf]
    %v1029 = vld [vmem:[%s4 + $0xd4] sm:$0xf]
    %v1030 = vld [vmem:[%s4 + $0xd8] sm:$0xf]
    %v1031 = vld [vmem:[%s4 + $0xdc] sm:$0xf]
    %v1032 = vld [vmem:[%s4 + $0xe0] sm:$0xf]
    %v1033 = vld [vmem:[%s4 + $0xe4] sm:$0xf]
    %v1034 = vld [vmem:[%s4 + $0xe8] sm:$0xf]
    %v1035 = vld [vmem:[%s4 + $0xec] sm:$0xf]
    %v1036 = vld [vmem:[%s4 + $0xf0] sm:$0xf]
    %v1037 = vld [vmem:[%s4 + $0xf4] sm:$0xf]
    %v1038 = vld [vmem:[%s4 + $0xf8] sm:$0xf]
    %v1039 = vld [vmem:[%s4 + $0xfc] sm:$0xf]
    %v1040 = vld [vmem:[%s4 + $0x100] sm:$0xf]
    %v1041 = vld [vmem:[%s4 + $0x104] sm:$0xf]
    %v1042 = vld [vmem:[%s4 + $0x108] sm:$0xf]
    %v1043 = vld [vmem:[%s4 + $0x10c] sm:$0xf]
    %v1044 = vld [vmem:[%s4 + $0x110] sm:$0xf]
    %v1045 = vld [vmem:[%s4 + $0x114] sm:$0xf]
    %v1046 = vld [vmem:[%s4 + $0x118] sm:$0xf]
    %v1047 = vld [vmem:[%s4 + $0x11c] sm:$0xf]
    %v1048 = vld [vmem:[%s4 + $0x120] sm:$0xf]
    %v1049 = vld [vmem:[%s4 + $0x124] sm:$0xf]
    %v1050 = vld [vmem:[%s4 + $0x128] sm:$0xf]
    %v1051 = vld [vmem:[%s4 + $0x12c] sm:$0xf]
    %v1052 = vld [vmem:[%s4 + $0x130] sm:$0xf]
    %v1053 = vld [vmem:[%s4 + $0x134] sm:$0xf]
    %v1054 = vld [vmem:[%s4 + $0x138] sm:$0xf]
    %v1055 = vld [vmem:[%s4 + $0x13c] sm:$0xf]
    %v1056 = vld [vmem:[%s4 + $0x140] sm:$0xf]
    %v1057 = vld [vmem:[%s4 + $0x144] sm:$0xf]
    %v1058 = vld [vmem:[%s4 + $0x148] sm:$0xf]
    %v1059 = vld [vmem:[%s4 + $0x14c] sm:$0xf]
    %v1060 = vld [vmem:[%s4 + $0x150] sm:$0xf]
    %v1061 = vld [vmem:[%s4 + $0x154] sm:$0xf]
    %v1062 = vld [vmem:[%s4 + $0x158] sm:$0xf]
    %v1063 = vld [vmem:[%s4 + $0x15c] sm:$0xf]
    %v1064 = vld [vmem:[%s4 + $0x160] sm:$0xf]
    %v1065 = vld [vmem:[%s4 + $0x164] sm:$0xf]
    %v1066 = vld [vmem:[%s4 + $0x168] sm:$0xf]
    %v1067 = vld [vmem:[%s4 + $0x16c] sm:$0xf]
    %v1068 = vld [vmem:[%s4 + $0x170] sm:$0xf]
    %v1069 = vld [vmem:[%s4 + $0x174] sm:$0xf]
    %v1070 = vld [vmem:[%s4 + $0x178] sm:$0xf]
    %v1071 = vld [vmem:[%s4 + $0x17c] sm:$0xf]
    %v1072 = vld [vmem:[%s5] sm:$0x1]
    %v1074 = vlaneseq
    %v1075 = vshrl.u32 %v1074, 7
    %v1076 = vsub.s32 0, %v1075
    %v1077 = vrot.slane %v1072, %v1076
    %v1175 = vunpack.c.l.b16 %v976
    %v1176 = vunpack.c.l.b16 %v977
    %v1177 = vunpack.c.l.b16 %v978
    %v1178 = vunpack.c.l.b16 %v979
    %v1179 = vunpack.c.l.b16 %v980
    %v1180 = vunpack.c.l.b16 %v981
    %v1181 = vunpack.c.l.b16 %v982
    %v1182 = vunpack.c.l.b16 %v983
    %v1183 = vunpack.c.l.b16 %v984
    %v1184 = vunpack.c.l.b16 %v985
    %v1185 = vunpack.c.l.b16 %v986
    %v1186 = vunpack.c.l.b16 %v987
    %v1187 = vunpack.c.l.b16 %v988
    %v1188 = vunpack.c.l.b16 %v989
    %v1189 = vunpack.c.l.b16 %v990
    %v1190 = vunpack.c.l.b16 %v991
    %v1191 = vunpack.c.l.b16 %v992
    %v1192 = vunpack.c.l.b16 %v993
    %v1193 = vunpack.c.l.b16 %v994
    %v1194 = vunpack.c.l.b16 %v995
    %v1195 = vunpack.c.l.b16 %v996
    %v1196 = vunpack.c.l.b16 %v997
    %v1197 = vunpack.c.l.b16 %v998
    %v1198 = vunpack.c.l.b16 %v999
    %v1199 = vunpack.c.l.b16 %v1000
    %v1200 = vunpack.c.l.b16 %v1001
    %v1201 = vunpack.c.l.b16 %v1002
    %v1202 = vunpack.c.l.b16 %v1003
    %v1203 = vunpack.c.l.b16 %v1004
    %v1204 = vunpack.c.l.b16 %v1005
    %v1205 = vunpack.c.l.b16 %v1006
    %v1206 = vunpack.c.l.b16 %v1007
    %v1207 = vunpack.c.l.b16 %v1008
    %v1208 = vunpack.c.l.b16 %v1009
    %v1209 = vunpack.c.l.b16 %v1010
    %v1210 = vunpack.c.l.b16 %v1011
    %v1211 = vunpack.c.l.b16 %v1012
    %v1212 = vunpack.c.l.b16 %v1013
    %v1213 = vunpack.c.l.b16 %v1014
    %v1214 = vunpack.c.l.b16 %v1015
    %v1215 = vunpack.c.l.b16 %v1016
    %v1216 = vunpack.c.l.b16 %v1017
    %v1217 = vunpack.c.l.b16 %v1018
    %v1218 = vunpack.c.l.b16 %v1019
    %v1219 = vunpack.c.l.b16 %v1020
    %v1220 = vunpack.c.l.b16 %v1021
    %v1221 = vunpack.c.l.b16 %v1022
    %v1222 = vunpack.c.l.b16 %v1023
    %v1223 = vunpack.c.l.b16 %v1024
    %v1224 = vunpack.c.l.b16 %v1025
    %v1225 = vunpack.c.l.b16 %v1026
    %v1226 = vunpack.c.l.b16 %v1027
    %v1227 = vunpack.c.l.b16 %v1028
    %v1228 = vunpack.c.l.b16 %v1029
    %v1229 = vunpack.c.l.b16 %v1030
    %v1230 = vunpack.c.l.b16 %v1031
    %v1231 = vunpack.c.l.b16 %v1032
    %v1232 = vunpack.c.l.b16 %v1033
    %v1233 = vunpack.c.l.b16 %v1034
    %v1234 = vunpack.c.l.b16 %v1035
    %v1235 = vunpack.c.l.b16 %v1036
    %v1236 = vunpack.c.l.b16 %v1037
    %v1237 = vunpack.c.l.b16 %v1038
    %v1238 = vunpack.c.l.b16 %v1039
    %v1239 = vunpack.c.l.b16 %v1040
    %v1240 = vunpack.c.l.b16 %v1041
    %v1241 = vunpack.c.l.b16 %v1042
    %v1242 = vunpack.c.l.b16 %v1043
    %v1243 = vunpack.c.l.b16 %v1044
    %v1244 = vunpack.c.l.b16 %v1045
    %v1245 = vunpack.c.l.b16 %v1046
    %v1246 = vunpack.c.l.b16 %v1047
    %v1247 = vunpack.c.l.b16 %v1048
    %v1248 = vunpack.c.l.b16 %v1049
    %v1249 = vunpack.c.l.b16 %v1050
    %v1250 = vunpack.c.l.b16 %v1051
    %v1251 = vunpack.c.l.b16 %v1052
    %v1252 = vunpack.c.l.b16 %v1053
    %v1253 = vunpack.c.l.b16 %v1054
    %v1254 = vunpack.c.l.b16 %v1055
    %v1255 = vunpack.c.l.b16 %v1056
    %v1256 = vunpack.c.l.b16 %v1057
    %v1257 = vunpack.c.l.b16 %v1058
    %v1258 = vunpack.c.l.b16 %v1059
    %v1259 = vunpack.c.l.b16 %v1060
    %v1260 = vunpack.c.l.b16 %v1061
    %v1261 = vunpack.c.l.b16 %v1062
    %v1262 = vunpack.c.l.b16 %v1063
    %v1263 = vunpack.c.l.b16 %v1064
    %v1264 = vunpack.c.l.b16 %v1065
    %v1265 = vunpack.c.l.b16 %v1066
    %v1266 = vunpack.c.l.b16 %v1067
    %v1267 = vunpack.c.l.b16 %v1068
    %v1268 = vunpack.c.l.b16 %v1069
    %v1269 = vunpack.c.l.b16 %v1070
    %v1270 = vunpack.c.l.b16 %v1071
    %v1271 = vpack.c.b16 %v1176, %v1175
    %v1272 = vpack.c.b16 %v1178, %v1177
    %v1273 = vpack.c.b16 %v1180, %v1179
    %v1274 = vpack.c.b16 %v1182, %v1181
    %v1275 = vpack.c.b16 %v1184, %v1183
    %v1276 = vpack.c.b16 %v1186, %v1185
    %v1277 = vpack.c.b16 %v1188, %v1187
    %v1278 = vpack.c.b16 %v1190, %v1189
    %v1279 = vpack.c.b16 %v1192, %v1191
    %v1280 = vpack.c.b16 %v1194, %v1193
    %v1281 = vpack.c.b16 %v1196, %v1195
    %v1282 = vpack.c.b16 %v1198, %v1197
    %v1283 = vpack.c.b16 %v1200, %v1199
    %v1284 = vpack.c.b16 %v1202, %v1201
    %v1285 = vpack.c.b16 %v1204, %v1203
    %v1286 = vpack.c.b16 %v1206, %v1205
    %v1287 = vpack.c.b16 %v1208, %v1207
    %v1288 = vpack.c.b16 %v1210, %v1209
    %v1289 = vpack.c.b16 %v1212, %v1211
    %v1290 = vpack.c.b16 %v1214, %v1213
    %v1291 = vpack.c.b16 %v1216, %v1215
    %v1292 = vpack.c.b16 %v1218, %v1217
    %v1293 = vpack.c.b16 %v1220, %v1219
    %v1294 = vpack.c.b16 %v1222, %v1221
    %v1295 = vpack.c.b16 %v1224, %v1223
    %v1296 = vpack.c.b16 %v1226, %v1225
    %v1297 = vpack.c.b16 %v1228, %v1227
    %v1298 = vpack.c.b16 %v1230, %v1229
    %v1299 = vpack.c.b16 %v1232, %v1231
    %v1300 = vpack.c.b16 %v1234, %v1233
    %v1301 = vpack.c.b16 %v1236, %v1235
    %v1302 = vpack.c.b16 %v1238, %v1237
    %v1303 = vpack.c.b16 %v1240, %v1239
    %v1304 = vpack.c.b16 %v1242, %v1241
    %v1305 = vpack.c.b16 %v1244, %v1243
    %v1306 = vpack.c.b16 %v1246, %v1245
    %v1307 = vpack.c.b16 %v1248, %v1247
    %v1308 = vpack.c.b16 %v1250, %v1249
    %v1309 = vpack.c.b16 %v1252, %v1251
    %v1310 = vpack.c.b16 %v1254, %v1253
    %v1311 = vpack.c.b16 %v1256, %v1255
    %v1312 = vpack.c.b16 %v1258, %v1257
    %v1313 = vpack.c.b16 %v1260, %v1259
    %v1314 = vpack.c.b16 %v1262, %v1261
    %v1315 = vpack.c.b16 %v1264, %v1263
    %v1316 = vpack.c.b16 %v1266, %v1265
    %v1317 = vpack.c.b16 %v1268, %v1267
    %v1318 = vpack.c.b16 %v1270, %v1269
    %1367 = vmatprep.subr.bf16.mxu0 0
    %1368 = vmatpush1.bf16.msra.mxu0 %v1278
    %1369 = vmatprep.subr.bf16.mxu0 0
    %1370 = vmatpush1.bf16.msra.mxu0 %v1277
    %1371 = vmatprep.subr.bf16.mxu0 0
    %1372 = vmatpush1.bf16.msra.mxu0 %v1276
    %1373 = vmatprep.subr.bf16.mxu0 0
    %1374 = vmatpush1.bf16.msra.mxu0 %v1275
    %1375 = vmatprep.subr.bf16.mxu0 0
    %1376 = vmatpush1.bf16.msra.mxu0 %v1274
    %1377 = vmatprep.subr.bf16.mxu0 0
    %1378 = vmatpush1.bf16.msra.mxu0 %v1273
    %1379 = vmatprep.subr.bf16.mxu0 0
    %1380 = vmatpush1.bf16.msra.mxu0 %v1272
    %1381 = vmatprep.subr.bf16.mxu0 0
    %1382 = vmatpush1.bf16.msra.mxu0 %v1271
    %1383 = vmatprep.subr.bf16.mxu0 0
    %1384 = vmatpush2.bf16.msra.mxu0 %v1286
    %1385 = vmatprep.subr.bf16.mxu0 0
    %1386 = vmatpush2.bf16.msra.mxu0 %v1285
    %1387 = vmatprep.subr.bf16.mxu0 0
    %1388 = vmatpush2.bf16.msra.mxu0 %v1284
    %1389 = vmatprep.subr.bf16.mxu0 0
    %1390 = vmatpush2.bf16.msra.mxu0 %v1283
    %1391 = vmatprep.subr.bf16.mxu0 0
    %1392 = vmatpush2.bf16.msra.mxu0 %v1282
    %1393 = vmatprep.subr.bf16.mxu0 0
    %1394 = vmatpush2.bf16.msra.mxu0 %v1281
    %1395 = vmatprep.subr.bf16.mxu0 0
    %1396 = vmatpush2.bf16.msra.mxu0 %v1280
    %1397 = vmatprep.subr.bf16.mxu0 0
    %1398 = vmatpush2.bf16.msra.mxu0 %v1279
    %1399 = vmatprep.mubr.bf16.mxu0 %v971
    %1400 = vmatmul.mubr.bf16.gmra.mxu0 %v970
    %v1401 = vpop.f32.mrf.mxu0
    %v1402 = vadd.f32 %v1077, %v1401
    %v1403 = vpop.f32.mrf.mxu0
    %v1404 = vpop.f32.mrf.mxu0
    %v1405 = vpop.f32.mrf.mxu0
    %1406 = vdwg.mxu0
    %1407 = vmatprep.subr.bf16.mxu0 0
    %1408 = vmatpush1.bf16.msra.mxu0 %v1294
    %1409 = vmatprep.subr.bf16.mxu0 0
    %1410 = vmatpush1.bf16.msra.mxu0 %v1293
    %1411 = vmatprep.subr.bf16.mxu0 0
    %1412 = vmatpush1.bf16.msra.mxu0 %v1292
    %1413 = vmatprep.subr.bf16.mxu0 0
    %1414 = vmatpush1.bf16.msra.mxu0 %v1291
    %1415 = vmatprep.subr.bf16.mxu0 0
    %1416 = vmatpush1.bf16.msra.mxu0 %v1290
    %1417 = vmatprep.subr.bf16.mxu0 0
    %1418 = vmatpush1.bf16.msra.mxu0 %v1289
    %1419 = vmatprep.subr.bf16.mxu0 0
    %1420 = vmatpush1.bf16.msra.mxu0 %v1288
    %1421 = vmatprep.subr.bf16.mxu0 0
    %1422 = vmatpush1.bf16.msra.mxu0 %v1287
    %1423 = vmatprep.subr.bf16.mxu0 0
    %1424 = vmatpush2.bf16.msra.mxu0 %v1302
    %1425 = vmatprep.subr.bf16.mxu0 0
    %1426 = vmatpush2.bf16.msra.mxu0 %v1301
    %1427 = vmatprep.subr.bf16.mxu0 0
    %1428 = vmatpush2.bf16.msra.mxu0 %v1300
    %1429 = vmatprep.subr.bf16.mxu0 0
    %1430 = vmatpush2.bf16.msra.mxu0 %v1299
    %1431 = vmatprep.subr.bf16.mxu0 0
    %1432 = vmatpush2.bf16.msra.mxu0 %v1298
    %1433 = vmatprep.subr.bf16.mxu0 0
    %1434 = vmatpush2.bf16.msra.mxu0 %v1297
    %1435 = vmatprep.subr.bf16.mxu0 0
    %1436 = vmatpush2.bf16.msra.mxu0 %v1296
    %1437 = vmatprep.subr.bf16.mxu0 0
    %1438 = vmatpush2.bf16.msra.mxu0 %v1295
    %1439 = vmatprep.mubr.bf16.mxu0 %v973
    %1440 = vmatmul.mubr.bf16.gmra.mxu0 %v972
    %v1441 = vpop.f32.mrf.mxu0
    %v1442 = vadd.f32 %v1402, %v1441
    %v1443 = vpop.f32.mrf.mxu0
    %v1444 = vpop.f32.mrf.mxu0
    %v1445 = vpop.f32.mrf.mxu0
    %1446 = vdwg.mxu0
    %1447 = vmatprep.subr.bf16.mxu0 0
    %1448 = vmatpush1.bf16.msra.mxu0 %v1310
    %1449 = vmatprep.subr.bf16.mxu0 0
    %1450 = vmatpush1.bf16.msra.mxu0 %v1309
    %1451 = vmatprep.subr.bf16.mxu0 0
    %1452 = vmatpush1.bf16.msra.mxu0 %v1308
    %1453 = vmatprep.subr.bf16.mxu0 0
    %1454 = vmatpush1.bf16.msra.mxu0 %v1307
    %1455 = vmatprep.subr.bf16.mxu0 0
    %1456 = vmatpush1.bf16.msra.mxu0 %v1306
    %1457 = vmatprep.subr.bf16.mxu0 0
    %1458 = vmatpush1.bf16.msra.mxu0 %v1305
    %1459 = vmatprep.subr.bf16.mxu0 0
    %1460 = vmatpush1.bf16.msra.mxu0 %v1304
    %1461 = vmatprep.subr.bf16.mxu0 0
    %1462 = vmatpush1.bf16.msra.mxu0 %v1303
    %1463 = vmatprep.subr.bf16.mxu0 0
    %1464 = vmatpush2.bf16.msra.mxu0 %v1318
    %1465 = vmatprep.subr.bf16.mxu0 0
    %1466 = vmatpush2.bf16.msra.mxu0 %v1317
    %1467 = vmatprep.subr.bf16.mxu0 0
    %1468 = vmatpush2.bf16.msra.mxu0 %v1316
    %1469 = vmatprep.subr.bf16.mxu0 0
    %1470 = vmatpush2.bf16.msra.mxu0 %v1315
    %1471 = vmatprep.subr.bf16.mxu0 0
    %1472 = vmatpush2.bf16.msra.mxu0 %v1314
    %1473 = vmatprep.subr.bf16.mxu0 0
    %1474 = vmatpush2.bf16.msra.mxu0 %v1313
    %1475 = vmatprep.subr.bf16.mxu0 0
    %1476 = vmatpush2.bf16.msra.mxu0 %v1312
    %1477 = vmatprep.subr.bf16.mxu0 0
    %1478 = vmatpush2.bf16.msra.mxu0 %v1311
    %1479 = vmatprep.mubr.bf16.mxu0 %v975
    %1480 = vmatmul.mubr.bf16.gmra.mxu0 %v974
    %v1481 = vpop.f32.mrf.mxu0
    %v1482 = vadd.f32 %v1442, %v1481
    %v1483 = vpop.f32.mrf.mxu0
    %v1484 = vpop.f32.mrf.mxu0
    %v1485 = vpop.f32.mrf.mxu0
    %1486 = vdwg.mxu0
    %1487 = vst [vmem:[#allocation2] sm:$0xff] %v1482
    // Predicated region
    $region26: #{bert_classifier_forward.1} parent=1 // pred_check
      _
    $region27: #{bert_classifier_forward.1} parent=1 // pred_check_branch
      %1489 = sbr.rel (0) target = $region29
    $region28: #{bert_classifier_forward.1} parent=1 // pred_region
      %s1491 = ssub.s32 128, 128
      %1492 = vsyncadd [#allocation3], %s1491
      %s1494 = sshll.u32 [#allocation2], 4
      %s1495 = int_to_ptr.vmem [resolvable:$true] %s1494
      %1497 = dma.vmem_to_hbm [thread:$0]  %s1495, 128, %s6, [#allocation3]
    $region29: #{bert_classifier_forward.1} parent=1 // pred_fallthru
      _
    // Predicated region
    $region30: #{bert_classifier_forward.1} parent=1 // pred_check
      _
    $region31: #{bert_classifier_forward.1} parent=1 // pred_check_branch
      %1499 = sbr.rel (0) target = $region33
    $region32: #{bert_classifier_forward.1} parent=1 // pred_region
      %1500 = dma.done [#allocation3], 128
    $region33: #{bert_classifier_forward.1} parent=1 // pred_fallthru
      _
    %1501 = vsyncpa [#allocation3], 1

</llo_original>
